<compile_context>
chip_gen: v7x
topology: tpu7x:2x2x1
jax: 0.10.0
libtpu: 0.0.40
codegen_flags: <defaults>
</compile_context>

<pallas_src>
import jax
import jax.numpy as jnp
from jax.experimental import pallas as pl
from jax.experimental.pallas import tpu as pltpu

C_IN = 960       # conv2d58 in-channels / conv2d59 out-channels
C_HID = 240      # conv2d58 out-channels (hidden)
C_HID_PAD = 256  # hidden padded to a multiple of 128 (lane-dense)


def _bottleneck_kernel(x_ref, w1_ref, b1_ref, w2_ref, b2_ref, o_ref):
    # x_ref : (M, 960)    f32   flattened NCHW -> (N*H*W, C_in)
    # w1_ref: (960, 256)  bf16  conv2d58 weight, transposed + hidden zero-padded
    # b1_ref: (1, 256)    f32   zero-padded
    # w2_ref: (256, 960)  bf16  conv2d59 weight, transposed + hidden zero-padded
    # b2_ref: (1, 960)    f32
    # o_ref : (M, 960)    f32
    x = x_ref[...].astype(jnp.bfloat16)
    h = jnp.dot(x, w1_ref[...], preferred_element_type=jnp.float32) + b1_ref[...]
    h = jnp.maximum(h, 0.0)  # ReLU; padded hidden lanes stay exactly 0
    y = jnp.dot(h.astype(jnp.bfloat16), w2_ref[...],
                preferred_element_type=jnp.float32) + b2_ref[...]
    o_ref[...] = y.astype(o_ref.dtype)


def prepare_params(w1, b1, w2, b2):
    """One-time parameter prep (call at init time, NOT inside the forward path):
    transpose to (C_in, C_out), zero-pad hidden 240->256, cast weights to bf16."""
    w1p = jnp.zeros((C_IN, C_HID_PAD), jnp.float32).at[:, :C_HID].set(w1.T)
    b1p = jnp.zeros((1, C_HID_PAD), jnp.float32).at[:, :C_HID].set(b1)
    w2p = jnp.zeros((C_HID_PAD, C_IN), jnp.float32).at[:C_HID, :].set(w2.T)
    b2p = b2.reshape(1, C_IN).astype(jnp.float32)
    return (w1p.astype(jnp.bfloat16), b1p, w2p.astype(jnp.bfloat16), b2p)


@jax.jit
def se_bottleneck(x_nchw, w1p, b1p, w2p, b2p):
    """x_nchw: (N, 960, H, W) with H = W = 1. Returns (N, 960, H, W) float32."""
    N, C, H, W = x_nchw.shape
    assert C == C_IN and H == 1 and W == 1
    M = N * H * W
    # 1x1 spatial => pure metadata reshape, no transpose / data movement.
    x2d = x_nchw.reshape(M, C_IN)

    weight_bytes = (C_IN * C_HID_PAD + C_HID_PAD * C_IN) * 2  # bf16
    bias_bytes = (C_HID_PAD + C_IN) * 4
    io_bytes = 2 * M * C_IN * 4

    out2d = pl.pallas_call(
        _bottleneck_kernel,
        out_shape=jax.ShapeDtypeStruct((M, C_IN), x_nchw.dtype),
        grid_spec=pltpu.PrefetchScalarGridSpec(
            num_scalar_prefetch=0,
            grid=(1,),
            in_specs=[
                pl.BlockSpec((M, C_IN), lambda i: (0, 0)),
                pl.BlockSpec((C_IN, C_HID_PAD), lambda i: (0, 0)),
                pl.BlockSpec((1, C_HID_PAD), lambda i: (0, 0)),
                pl.BlockSpec((C_HID_PAD, C_IN), lambda i: (0, 0)),
                pl.BlockSpec((1, C_IN), lambda i: (0, 0)),
            ],
            out_specs=pl.BlockSpec((M, C_IN), lambda i: (0, 0)),
        ),
        compiler_params=pltpu.CompilerParams(
            dimension_semantics=("arbitrary",),
        ),
        cost_estimate=pl.CostEstimate(
            flops=2 * M * (C_IN * C_HID_PAD + C_HID_PAD * C_IN),
            transcendentals=0,
            bytes_accessed=weight_bytes + bias_bytes + io_bytes,
        ),
    )(x2d, w1p, b1p, w2p, b2p)

    return out2d.reshape(N, C_IN, H, W)


def _ref_same_precision(x_nchw, w1p, b1p, w2p, b2p):
    # Mirrors the kernel's precision exactly (bf16 operands, f32 accumulate).
    N = x_nchw.shape[0]
    x2d = x_nchw.reshape(N, C_IN).astype(jnp.bfloat16)
    h = jnp.maximum(jnp.dot(x2d, w1p, preferred_element_type=jnp.float32) + b1p, 0.0)
    y = jnp.dot(h.astype(jnp.bfloat16), w2p, preferred_element_type=jnp.float32) + b2p
    return y.reshape(N, C_IN, 1, 1)


def _ref_f32(x_nchw, w1, b1, w2, b2):
    # Full-f32 equivalent of the PyTorch module.
    N = x_nchw.shape[0]
    x2d = x_nchw.reshape(N, C_IN)
    h = jnp.maximum(x2d @ w1.T + b1, 0.0)
    y = h @ w2.T + b2
    return y.reshape(N, C_IN, 1, 1)


if __name__ == "__main__":
    key = jax.random.PRNGKey(0)
    k_x, k_w1, k_b1, k_w2, k_b2 = jax.random.split(key, 5)

    # Input shape implied by the module: (1, 960, 1, 1)
    x = jax.random.normal(k_x, (1, C_IN, 1, 1), dtype=jnp.float32)

    # PyTorch-style uniform init for 1x1 convs.
    bound1 = 1.0 / (C_IN ** 0.5)
    w1 = jax.random.uniform(k_w1, (C_HID, C_IN), jnp.float32, -bound1, bound1)
    b1 = jax.random.uniform(k_b1, (C_HID,), jnp.float32, -bound1, bound1)

    bound2 = 1.0 / (C_HID ** 0.5)
    w2 = jax.random.uniform(k_w2, (C_IN, C_HID), jnp.float32, -bound2, bound2)
    b2 = jax.random.uniform(k_b2, (C_IN,), jnp.float32, -bound2, bound2)

    params = prepare_params(w1, b1, w2, b2)  # one-time, outside the forward path

    out = se_bottleneck(x, *params)
    out = jax.block_until_ready(out)
    assert out.shape == (1, C_IN, 1, 1), out.shape

    # Tight check vs a same-precision (bf16 weights, f32 accum) reference.
    ref_p = _ref_same_precision(x, *params)
    assert jnp.allclose(out, ref_p, atol=1e-3, rtol=1e-3), (
        "mismatch vs same-precision reference, max abs err = "
        f"{jnp.max(jnp.abs(out - ref_p))}")

    # Loose sanity check vs the full-f32 module semantics (bf16 quantization only).
    ref_full = _ref_f32(x, w1, b1, w2, b2)
    assert jnp.allclose(out, ref_full, atol=5e-2, rtol=5e-2), (
        "mismatch vs f32 reference, max abs err = "
        f"{jnp.max(jnp.abs(out - ref_full))}")

    print("KERNEL_OK")
</pallas_src>

<mosaic_0001>
module attributes {stable_mosaic.version = 11 : i64} {
  func.func @_bottleneck_kernel(%arg0: i32, %arg1: memref<1x960xf32, #tpu.memory_space<vmem>>, %arg2: memref<960x256xbf16, #tpu.memory_space<vmem>>, %arg3: memref<1x256xf32, #tpu.memory_space<vmem>>, %arg4: memref<256x960xbf16, #tpu.memory_space<vmem>>, %arg5: memref<1x960xf32, #tpu.memory_space<vmem>>, %arg6: memref<1x960xf32, #tpu.memory_space<vmem>>) attributes {dimension_semantics = [#tpu.dimension_semantics<arbitrary>], iteration_bounds = array<i64: 1>, scalar_prefetch = 0 : i64, scratch_operands = 0 : i64, tpu.core_type = #tpu.core_type<tc>, window_params = [{pipeline_mode = #tpu.pipeline_mode<synchronous>, transform_indices = @transform_0, window_bounds = array<i64: 1, 960>}, {pipeline_mode = #tpu.pipeline_mode<synchronous>, transform_indices = @transform_1, window_bounds = array<i64: 960, 256>}, {pipeline_mode = #tpu.pipeline_mode<synchronous>, transform_indices = @transform_2, window_bounds = array<i64: 1, 256>}, {pipeline_mode = #tpu.pipeline_mode<synchronous>, transform_indices = @transform_3, window_bounds = array<i64: 256, 960>}, {pipeline_mode = #tpu.pipeline_mode<synchronous>, transform_indices = @transform_4, window_bounds = array<i64: 1, 960>}, {pipeline_mode = #tpu.pipeline_mode<synchronous>, transform_indices = @transform_5, window_bounds = array<i64: 1, 960>}]} {
    %c0 = arith.constant 0 : index
    %c0_0 = arith.constant 0 : index
    %0 = vector.load %arg1[%c0, %c0_0] : memref<1x960xf32, #tpu.memory_space<vmem>>, vector<1x960xf32>
    %1 = arith.truncf %0 : vector<1x960xf32> to vector<1x960xbf16>
    %c0_1 = arith.constant 0 : index
    %c0_2 = arith.constant 0 : index
    %2 = vector.load %arg2[%c0_1, %c0_2] : memref<960x256xbf16, #tpu.memory_space<vmem>>, vector<960x256xbf16>
    %cst = arith.constant dense<0.000000e+00> : vector<1x256xf32>
    %3 = tpu.matmul %1, %2, %cst {dimension_numbers = #tpu.dot_dimension_numbers<[1], [0], [0], [1], [0, 0, 1, 1], [], []>} : vector<1x960xbf16>, vector<960x256xbf16>, vector<1x256xf32> -> vector<1x256xf32>
    %c0_3 = arith.constant 0 : index
    %c0_4 = arith.constant 0 : index
    %4 = vector.load %arg3[%c0_3, %c0_4] : memref<1x256xf32, #tpu.memory_space<vmem>>, vector<1x256xf32>
    %5 = arith.addf %3, %4 : vector<1x256xf32>
    %cst_5 = arith.constant 0.000000e+00 : f32
    %6 = vector.broadcast %cst_5 : f32 to vector<1x256xf32>
    %7 = arith.maximumf %5, %6 : vector<1x256xf32>
    %8 = arith.truncf %7 : vector<1x256xf32> to vector<1x256xbf16>
    %c0_6 = arith.constant 0 : index
    %c0_7 = arith.constant 0 : index
    %9 = vector.load %arg4[%c0_6, %c0_7] : memref<256x960xbf16, #tpu.memory_space<vmem>>, vector<256x960xbf16>
    %cst_8 = arith.constant dense<0.000000e+00> : vector<1x960xf32>
    %10 = tpu.matmul %8, %9, %cst_8 {dimension_numbers = #tpu.dot_dimension_numbers<[1], [0], [0], [1], [0, 0, 1, 1], [], []>} : vector<1x256xbf16>, vector<256x960xbf16>, vector<1x960xf32> -> vector<1x960xf32>
    %c0_9 = arith.constant 0 : index
    %c0_10 = arith.constant 0 : index
    %11 = vector.load %arg5[%c0_9, %c0_10] : memref<1x960xf32, #tpu.memory_space<vmem>>, vector<1x960xf32>
    %12 = arith.addf %10, %11 : vector<1x960xf32>
    %c0_11 = arith.constant 0 : index
    %c0_12 = arith.constant 0 : index
    %13 = vector.load %arg6[%c0_11, %c0_12] : memref<1x960xf32, #tpu.memory_space<vmem>>, vector<1x960xf32>
    tpu.vector_store %arg6[%c0_11, %c0_12], %12 {strides = array<i32>} : memref<1x960xf32, #tpu.memory_space<vmem>>, vector<1x960xf32>,
    return
  }
  func.func @transform_0(%arg0: i32) -> (i32, i32) {
    %c0_i32 = arith.constant 0 : i32
    %c0_i32_0 = arith.constant 0 : i32
    %c0_i32_1 = arith.constant 0 : i32
    return %c0_i32, %c0_i32_0 : i32, i32
  }
  func.func @transform_1(%arg0: i32) -> (i32, i32) {
    %c0_i32 = arith.constant 0 : i32
    %c0_i32_0 = arith.constant 0 : i32
    %c0_i32_1 = arith.constant 0 : i32
    return %c0_i32, %c0_i32_0 : i32, i32
  }
  func.func @transform_2(%arg0: i32) -> (i32, i32) {
    %c0_i32 = arith.constant 0 : i32
    %c0_i32_0 = arith.constant 0 : i32
    %c0_i32_1 = arith.constant 0 : i32
    return %c0_i32, %c0_i32_0 : i32, i32
  }
  func.func @transform_3(%arg0: i32) -> (i32, i32) {
    %c0_i32 = arith.constant 0 : i32
    %c0_i32_0 = arith.constant 0 : i32
    %c0_i32_1 = arith.constant 0 : i32
    return %c0_i32, %c0_i32_0 : i32, i32
  }
  func.func @transform_4(%arg0: i32) -> (i32, i32) {
    %c0_i32 = arith.constant 0 : i32
    %c0_i32_0 = arith.constant 0 : i32
    %c0_i32_1 = arith.constant 0 : i32
    return %c0_i32, %c0_i32_0 : i32, i32
  }
  func.func @transform_5(%arg0: i32) -> (i32, i32) {
    %c0_i32 = arith.constant 0 : i32
    %c0_i32_0 = arith.constant 0 : i32
    %c0_i32_1 = arith.constant 0 : i32
    return %c0_i32, %c0_i32_0 : i32, i32
  }
}

</mosaic_0001>

<llo_original>
// kernel: se_bottleneck.1
$region0: #{se_bottleneck.1}
  #allocation0 [shape = 'u32[]', space=smem, size = 0x4, offset = 0x4, fixed_abs, tag = 'smem constant byte address 0x4 - core index']
  #allocation1 [shape = 'u32[144,128]{1,0:T(1,128)}', space=vmem, size = 0x12000, scoped, tag = 'internal scratch']
  %s0 = inlined_call_operand.vmem [shape: f32[1,960], index: 0, kind: input, shape index: {}]
  %s1 = inlined_call_operand.vmem [shape: bf16[960,256], index: 1, kind: input, shape index: {}]
  %s2 = inlined_call_operand.vmem [shape: f32[1,256], index: 2, kind: input, shape index: {}]
  %s3 = inlined_call_operand.vmem [shape: bf16[256,960], index: 3, kind: input, shape index: {}]
  %s4 = inlined_call_operand.vmem [shape: f32[1,960], index: 4, kind: input, shape index: {}]
  %s5 = inlined_call_operand.hbm [shape: f32[1,960], index: 5, kind: output, shape index: {}]
  %s6 = sld [smem:[#allocation0]]
  $region30: #{se_bottleneck.1} parent=0
    _
  %s8 = ssub.s32 1, %s6
  %s9 = scalar_select 0, %s8, %s6
  $region1: #{se_bottleneck.1} parent=0
    #allocation2 [shape = 'u8[4096]{0}', space=vmem, size = 0x1000, scoped, tag = 'output window, operand 0, single buffered']
    #allocation3 [shape = 's32[1]{0}', space=sflag, size = 0x4, scoped, tag = 'scoped memory for se_bottleneck.1']
    %10 = vsyncpa [#allocation3], 0
    // Predicated region
    $region2: #{se_bottleneck.1} parent=1 // pred_check
      _
    $region3: #{se_bottleneck.1} parent=1 // pred_check_branch
      %12 = sbr.rel (0) target = $region5
    $region4: #{se_bottleneck.1} parent=1 // pred_region
      _
    $region5: #{se_bottleneck.1} parent=1 // pred_fallthru
      _
    // Predicated region
    $region6: #{se_bottleneck.1} parent=1 // pred_check
      _
    $region7: #{se_bottleneck.1} parent=1 // pred_check_branch
      %14 = sbr.rel (0) target = $region9
    $region8: #{se_bottleneck.1} parent=1 // pred_region
      _
    $region9: #{se_bottleneck.1} parent=1 // pred_fallthru
      _
    // Predicated region
    $region10: #{se_bottleneck.1} parent=1 // pred_check
      _
    $region11: #{se_bottleneck.1} parent=1 // pred_check_branch
      %16 = sbr.rel (0) target = $region13
    $region12: #{se_bottleneck.1} parent=1 // pred_region
      _
    $region13: #{se_bottleneck.1} parent=1 // pred_fallthru
      _
    // Predicated region
    $region14: #{se_bottleneck.1} parent=1 // pred_check
      _
    $region15: #{se_bottleneck.1} parent=1 // pred_check_branch
      %18 = sbr.rel (0) target = $region17
    $region16: #{se_bottleneck.1} parent=1 // pred_region
      _
    $region17: #{se_bottleneck.1} parent=1 // pred_fallthru
      _
    // Predicated region
    $region18: #{se_bottleneck.1} parent=1 // pred_check
      _
    $region19: #{se_bottleneck.1} parent=1 // pred_check_branch
      %20 = sbr.rel (0) target = $region21
    $region20: #{se_bottleneck.1} parent=1 // pred_region
      _
    $region21: #{se_bottleneck.1} parent=1 // pred_fallthru
      _
    %v22 = vld [vmem:[%s0] sm:$0xff]
    %v24 = vlaneseq
    %v25 = vshrl.u32 %v24, 7
    %v26 = vsub.s32 0, %v25
    %v27 = vrot.slane %v22, %v26
    %v28 = vlaneseq
    %v29 = vshrl.u32 %v28, 7
    %v30 = vsub.s32 1, %v29
    %v31 = vrot.slane %v22, %v30
    %v32 = vlaneseq
    %v33 = vshrl.u32 %v32, 7
    %v34 = vsub.s32 2, %v33
    %v35 = vrot.slane %v22, %v34
    %v36 = vlaneseq
    %v37 = vshrl.u32 %v36, 7
    %v38 = vsub.s32 3, %v37
    %v39 = vrot.slane %v22, %v38
    %v40 = vlaneseq
    %v41 = vshrl.u32 %v40, 7
    %v42 = vsub.s32 4, %v41
    %v43 = vrot.slane %v22, %v42
    %v44 = vlaneseq
    %v45 = vshrl.u32 %v44, 7
    %v46 = vsub.s32 5, %v45
    %v47 = vrot.slane %v22, %v46
    %v48 = vlaneseq
    %v49 = vshrl.u32 %v48, 7
    %v50 = vsub.s32 6, %v49
    %v51 = vrot.slane %v22, %v50
    %v52 = vlaneseq
    %v53 = vshrl.u32 %v52, 7
    %v54 = vsub.s32 7, %v53
    %v55 = vrot.slane %v22, %v54
    %v64 = vpack.c.bf16 %v27, %v27
    %v65 = vpack.c.bf16 %v31, %v31
    %v66 = vpack.c.bf16 %v35, %v35
    %v67 = vpack.c.bf16 %v39, %v39
    %v68 = vpack.c.bf16 %v43, %v43
    %v69 = vpack.c.bf16 %v47, %v47
    %v70 = vpack.c.bf16 %v51, %v51
    %v71 = vpack.c.bf16 %v55, %v55
    %v72 = vld [vmem:[%s1] sm:$0xff]
    %v73 = vld [vmem:[%s1 + $0x8] sm:$0xff]
    %v74 = vld [vmem:[%s1 + $0x10] sm:$0xff]
    %v75 = vld [vmem:[%s1 + $0x18] sm:$0xff]
    %v76 = vld [vmem:[%s1 + $0x20] sm:$0xff]
    %v77 = vld [vmem:[%s1 + $0x28] sm:$0xff]
    %v78 = vld [vmem:[%s1 + $0x30] sm:$0xff]
    %v79 = vld [vmem:[%s1 + $0x38] sm:$0xff]
    %v80 = vld [vmem:[%s1 + $0x40] sm:$0xff]
    %v81 = vld [vmem:[%s1 + $0x48] sm:$0xff]
    %v82 = vld [vmem:[%s1 + $0x50] sm:$0xff]
    %v83 = vld [vmem:[%s1 + $0x58] sm:$0xff]
    %v84 = vld [vmem:[%s1 + $0x60] sm:$0xff]
    %v85 = vld [vmem:[%s1 + $0x68] sm:$0xff]
    %v86 = vld [vmem:[%s1 + $0x70] sm:$0xff]
    %v87 = vld [vmem:[%s1 + $0x78] sm:$0xff]
    %v88 = vld [vmem:[%s1 + $0x80] sm:$0xff]
    %v89 = vld [vmem:[%s1 + $0x88] sm:$0xff]
    %v90 = vld [vmem:[%s1 + $0x90] sm:$0xff]
    %v91 = vld [vmem:[%s1 + $0x98] sm:$0xff]
    %v92 = vld [vmem:[%s1 + $0xa0] sm:$0xff]
    %v93 = vld [vmem:[%s1 + $0xa8] sm:$0xff]
    %v94 = vld [vmem:[%s1 + $0xb0] sm:$0xff]
    %v95 = vld [vmem:[%s1 + $0xb8] sm:$0xff]
    %v96 = vld [vmem:[%s1 + $0xc0] sm:$0xff]
    %v97 = vld [vmem:[%s1 + $0xc8] sm:$0xff]
    %v98 = vld [vmem:[%s1 + $0xd0] sm:$0xff]
    %v99 = vld [vmem:[%s1 + $0xd8] sm:$0xff]
    %v100 = vld [vmem:[%s1 + $0xe0] sm:$0xff]
    %v101 = vld [vmem:[%s1 + $0xe8] sm:$0xff]
    %v102 = vld [vmem:[%s1 + $0xf0] sm:$0xff]
    %v103 = vld [vmem:[%s1 + $0xf8] sm:$0xff]
    %v104 = vld [vmem:[%s1 + $0x100] sm:$0xff]
    %v105 = vld [vmem:[%s1 + $0x108] sm:$0xff]
    %v106 = vld [vmem:[%s1 + $0x110] sm:$0xff]
    %v107 = vld [vmem:[%s1 + $0x118] sm:$0xff]
    %v108 = vld [vmem:[%s1 + $0x120] sm:$0xff]
    %v109 = vld [vmem:[%s1 + $0x128] sm:$0xff]
    %v110 = vld [vmem:[%s1 + $0x130] sm:$0xff]
    %v111 = vld [vmem:[%s1 + $0x138] sm:$0xff]
    %v112 = vld [vmem:[%s1 + $0x140] sm:$0xff]
    %v113 = vld [vmem:[%s1 + $0x148] sm:$0xff]
    %v114 = vld [vmem:[%s1 + $0x150] sm:$0xff]
    %v115 = vld [vmem:[%s1 + $0x158] sm:$0xff]
    %v116 = vld [vmem:[%s1 + $0x160] sm:$0xff]
    %v117 = vld [vmem:[%s1 + $0x168] sm:$0xff]
    %v118 = vld [vmem:[%s1 + $0x170] sm:$0xff]
    %v119 = vld [vmem:[%s1 + $0x178] sm:$0xff]
    %v120 = vld [vmem:[%s1 + $0x180] sm:$0xff]
    %v121 = vld [vmem:[%s1 + $0x188] sm:$0xff]
    %v122 = vld [vmem:[%s1 + $0x190] sm:$0xff]
    %v123 = vld [vmem:[%s1 + $0x198] sm:$0xff]
    %v124 = vld [vmem:[%s1 + $0x1a0] sm:$0xff]
    %v125 = vld [vmem:[%s1 + $0x1a8] sm:$0xff]
    %v126 = vld [vmem:[%s1 + $0x1b0] sm:$0xff]
    %v127 = vld [vmem:[%s1 + $0x1b8] sm:$0xff]
    %v128 = vld [vmem:[%s1 + $0x1c0] sm:$0xff]
    %v129 = vld [vmem:[%s1 + $0x1c8] sm:$0xff]
    %v130 = vld [vmem:[%s1 + $0x1d0] sm:$0xff]
    %v131 = vld [vmem:[%s1 + $0x1d8] sm:$0xff]
    %v132 = vld [vmem:[%s1 + $0x1e0] sm:$0xff]
    %v133 = vld [vmem:[%s1 + $0x1e8] sm:$0xff]
    %v134 = vld [vmem:[%s1 + $0x1f0] sm:$0xff]
    %v135 = vld [vmem:[%s1 + $0x1f8] sm:$0xff]
    %v136 = vld [vmem:[%s1 + $0x200] sm:$0xff]
    %v137 = vld [vmem:[%s1 + $0x208] sm:$0xff]
    %v138 = vld [vmem:[%s1 + $0x210] sm:$0xff]
    %v139 = vld [vmem:[%s1 + $0x218] sm:$0xff]
    %v140 = vld [vmem:[%s1 + $0x220] sm:$0xff]
    %v141 = vld [vmem:[%s1 + $0x228] sm:$0xff]
    %v142 = vld [vmem:[%s1 + $0x230] sm:$0xff]
    %v143 = vld [vmem:[%s1 + $0x238] sm:$0xff]
    %v144 = vld [vmem:[%s1 + $0x240] sm:$0xff]
    %v145 = vld [vmem:[%s1 + $0x248] sm:$0xff]
    %v146 = vld [vmem:[%s1 + $0x250] sm:$0xff]
    %v147 = vld [vmem:[%s1 + $0x258] sm:$0xff]
    %v148 = vld [vmem:[%s1 + $0x260] sm:$0xff]
    %v149 = vld [vmem:[%s1 + $0x268] sm:$0xff]
    %v150 = vld [vmem:[%s1 + $0x270] sm:$0xff]
    %v151 = vld [vmem:[%s1 + $0x278] sm:$0xff]
    %v152 = vld [vmem:[%s1 + $0x280] sm:$0xff]
    %v153 = vld [vmem:[%s1 + $0x288] sm:$0xff]
    %v154 = vld [vmem:[%s1 + $0x290] sm:$0xff]
    %v155 = vld [vmem:[%s1 + $0x298] sm:$0xff]
    %v156 = vld [vmem:[%s1 + $0x2a0] sm:$0xff]
    %v157 = vld [vmem:[%s1 + $0x2a8] sm:$0xff]
    %v158 = vld [vmem:[%s1 + $0x2b0] sm:$0xff]
    %v159 = vld [vmem:[%s1 + $0x2b8] sm:$0xff]
    %v160 = vld [vmem:[%s1 + $0x2c0] sm:$0xff]
    %v161 = vld [vmem:[%s1 + $0x2c8] sm:$0xff]
    %v162 = vld [vmem:[%s1 + $0x2d0] sm:$0xff]
    %v163 = vld [vmem:[%s1 + $0x2d8] sm:$0xff]
    %v164 = vld [vmem:[%s1 + $0x2e0] sm:$0xff]
    %v165 = vld [vmem:[%s1 + $0x2e8] sm:$0xff]
    %v166 = vld [vmem:[%s1 + $0x2f0] sm:$0xff]
    %v167 = vld [vmem:[%s1 + $0x2f8] sm:$0xff]
    %v168 = vld [vmem:[%s1 + $0x300] sm:$0xff]
    %v169 = vld [vmem:[%s1 + $0x308] sm:$0xff]
    %v170 = vld [vmem:[%s1 + $0x310] sm:$0xff]
    %v171 = vld [vmem:[%s1 + $0x318] sm:$0xff]
    %v172 = vld [vmem:[%s1 + $0x320] sm:$0xff]
    %v173 = vld [vmem:[%s1 + $0x328] sm:$0xff]
    %v174 = vld [vmem:[%s1 + $0x330] sm:$0xff]
    %v175 = vld [vmem:[%s1 + $0x338] sm:$0xff]
    %v176 = vld [vmem:[%s1 + $0x340] sm:$0xff]
    %v177 = vld [vmem:[%s1 + $0x348] sm:$0xff]
    %v178 = vld [vmem:[%s1 + $0x350] sm:$0xff]
    %v179 = vld [vmem:[%s1 + $0x358] sm:$0xff]
    %v180 = vld [vmem:[%s1 + $0x360] sm:$0xff]
    %v181 = vld [vmem:[%s1 + $0x368] sm:$0xff]
    %v182 = vld [vmem:[%s1 + $0x370] sm:$0xff]
    %v183 = vld [vmem:[%s1 + $0x378] sm:$0xff]
    %v184 = vld [vmem:[%s1 + $0x380] sm:$0xff]
    %v185 = vld [vmem:[%s1 + $0x388] sm:$0xff]
    %v186 = vld [vmem:[%s1 + $0x390] sm:$0xff]
    %v187 = vld [vmem:[%s1 + $0x398] sm:$0xff]
    %v188 = vld [vmem:[%s1 + $0x3a0] sm:$0xff]
    %v189 = vld [vmem:[%s1 + $0x3a8] sm:$0xff]
    %v190 = vld [vmem:[%s1 + $0x3b0] sm:$0xff]
    %v191 = vld [vmem:[%s1 + $0x3b8] sm:$0xff]
    %v192 = vld [vmem:[%s2] sm:$0x3]
    %v313 = vunpack.c.l.b16 %v72
    %v314 = vunpack.c.h.b16 %v72
    %v315 = vunpack.c.l.b16 %v73
    %v316 = vunpack.c.h.b16 %v73
    %v317 = vunpack.c.l.b16 %v74
    %v318 = vunpack.c.h.b16 %v74
    %v319 = vunpack.c.l.b16 %v75
    %v320 = vunpack.c.h.b16 %v75
    %v321 = vunpack.c.l.b16 %v76
    %v322 = vunpack.c.h.b16 %v76
    %v323 = vunpack.c.l.b16 %v77
    %v324 = vunpack.c.h.b16 %v77
    %v325 = vunpack.c.l.b16 %v78
    %v326 = vunpack.c.h.b16 %v78
    %v327 = vunpack.c.l.b16 %v79
    %v328 = vunpack.c.h.b16 %v79
    %v329 = vunpack.c.l.b16 %v80
    %v330 = vunpack.c.h.b16 %v80
    %v331 = vunpack.c.l.b16 %v81
    %v332 = vunpack.c.h.b16 %v81
    %v333 = vunpack.c.l.b16 %v82
    %v334 = vunpack.c.h.b16 %v82
    %v335 = vunpack.c.l.b16 %v83
    %v336 = vunpack.c.h.b16 %v83
    %v337 = vunpack.c.l.b16 %v84
    %v338 = vunpack.c.h.b16 %v84
    %v339 = vunpack.c.l.b16 %v85
    %v340 = vunpack.c.h.b16 %v85
    %v341 = vunpack.c.l.b16 %v86
    %v342 = vunpack.c.h.b16 %v86
    %v343 = vunpack.c.l.b16 %v87
    %v344 = vunpack.c.h.b16 %v87
    %v345 = vunpack.c.l.b16 %v88
    %v346 = vunpack.c.h.b16 %v88
    %v347 = vunpack.c.l.b16 %v89
    %v348 = vunpack.c.h.b16 %v89
    %v349 = vunpack.c.l.b16 %v90
    %v350 = vunpack.c.h.b16 %v90
    %v351 = vunpack.c.l.b16 %v91
    %v352 = vunpack.c.h.b16 %v91
    %v353 = vunpack.c.l.b16 %v92
    %v354 = vunpack.c.h.b16 %v92
    %v355 = vunpack.c.l.b16 %v93
    %v356 = vunpack.c.h.b16 %v93
    %v357 = vunpack.c.l.b16 %v94
    %v358 = vunpack.c.h.b16 %v94
    %v359 = vunpack.c.l.b16 %v95
    %v360 = vunpack.c.h.b16 %v95
    %v361 = vunpack.c.l.b16 %v96
    %v362 = vunpack.c.h.b16 %v96
    %v363 = vunpack.c.l.b16 %v97
    %v364 = vunpack.c.h.b16 %v97
    %v365 = vunpack.c.l.b16 %v98
    %v366 = vunpack.c.h.b16 %v98
    %v367 = vunpack.c.l.b16 %v99
    %v368 = vunpack.c.h.b16 %v99
    %v369 = vunpack.c.l.b16 %v100
    %v370 = vunpack.c.h.b16 %v100
    %v371 = vunpack.c.l.b16 %v101
    %v372 = vunpack.c.h.b16 %v101
    %v373 = vunpack.c.l.b16 %v102
    %v374 = vunpack.c.h.b16 %v102
    %v375 = vunpack.c.l.b16 %v103
    %v376 = vunpack.c.h.b16 %v103
    %v377 = vunpack.c.l.b16 %v104
    %v378 = vunpack.c.h.b16 %v104
    %v379 = vunpack.c.l.b16 %v105
    %v380 = vunpack.c.h.b16 %v105
    %v381 = vunpack.c.l.b16 %v106
    %v382 = vunpack.c.h.b16 %v106
    %v383 = vunpack.c.l.b16 %v107
    %v384 = vunpack.c.h.b16 %v107
    %v385 = vunpack.c.l.b16 %v108
    %v386 = vunpack.c.h.b16 %v108
    %v387 = vunpack.c.l.b16 %v109
    %v388 = vunpack.c.h.b16 %v109
    %v389 = vunpack.c.l.b16 %v110
    %v390 = vunpack.c.h.b16 %v110
    %v391 = vunpack.c.l.b16 %v111
    %v392 = vunpack.c.h.b16 %v111
    %v393 = vunpack.c.l.b16 %v112
    %v394 = vunpack.c.h.b16 %v112
    %v395 = vunpack.c.l.b16 %v113
    %v396 = vunpack.c.h.b16 %v113
    %v397 = vunpack.c.l.b16 %v114
    %v398 = vunpack.c.h.b16 %v114
    %v399 = vunpack.c.l.b16 %v115
    %v400 = vunpack.c.h.b16 %v115
    %v401 = vunpack.c.l.b16 %v116
    %v402 = vunpack.c.h.b16 %v116
    %v403 = vunpack.c.l.b16 %v117
    %v404 = vunpack.c.h.b16 %v117
    %v405 = vunpack.c.l.b16 %v118
    %v406 = vunpack.c.h.b16 %v118
    %v407 = vunpack.c.l.b16 %v119
    %v408 = vunpack.c.h.b16 %v119
    %v409 = vunpack.c.l.b16 %v120
    %v410 = vunpack.c.h.b16 %v120
    %v411 = vunpack.c.l.b16 %v121
    %v412 = vunpack.c.h.b16 %v121
    %v413 = vunpack.c.l.b16 %v122
    %v414 = vunpack.c.h.b16 %v122
    %v415 = vunpack.c.l.b16 %v123
    %v416 = vunpack.c.h.b16 %v123
    %v417 = vunpack.c.l.b16 %v124
    %v418 = vunpack.c.h.b16 %v124
    %v419 = vunpack.c.l.b16 %v125
    %v420 = vunpack.c.h.b16 %v125
    %v421 = vunpack.c.l.b16 %v126
    %v422 = vunpack.c.h.b16 %v126
    %v423 = vunpack.c.l.b16 %v127
    %v424 = vunpack.c.h.b16 %v127
    %v425 = vunpack.c.l.b16 %v128
    %v426 = vunpack.c.h.b16 %v128
    %v427 = vunpack.c.l.b16 %v129
    %v428 = vunpack.c.h.b16 %v129
    %v429 = vunpack.c.l.b16 %v130
    %v430 = vunpack.c.h.b16 %v130
    %v431 = vunpack.c.l.b16 %v131
    %v432 = vunpack.c.h.b16 %v131
    %v433 = vunpack.c.l.b16 %v132
    %v434 = vunpack.c.h.b16 %v132
    %v435 = vunpack.c.l.b16 %v133
    %v436 = vunpack.c.h.b16 %v133
    %v437 = vunpack.c.l.b16 %v134
    %v438 = vunpack.c.h.b16 %v134
    %v439 = vunpack.c.l.b16 %v135
    %v440 = vunpack.c.h.b16 %v135
    %v441 = vunpack.c.l.b16 %v136
    %v442 = vunpack.c.h.b16 %v136
    %v443 = vunpack.c.l.b16 %v137
    %v444 = vunpack.c.h.b16 %v137
    %v445 = vunpack.c.l.b16 %v138
    %v446 = vunpack.c.h.b16 %v138
    %v447 = vunpack.c.l.b16 %v139
    %v448 = vunpack.c.h.b16 %v139
    %v449 = vunpack.c.l.b16 %v140
    %v450 = vunpack.c.h.b16 %v140
    %v451 = vunpack.c.l.b16 %v141
    %v452 = vunpack.c.h.b16 %v141
    %v453 = vunpack.c.l.b16 %v142
    %v454 = vunpack.c.h.b16 %v142
    %v455 = vunpack.c.l.b16 %v143
    %v456 = vunpack.c.h.b16 %v143
    %v457 = vunpack.c.l.b16 %v144
    %v458 = vunpack.c.h.b16 %v144
    %v459 = vunpack.c.l.b16 %v145
    %v460 = vunpack.c.h.b16 %v145
    %v461 = vunpack.c.l.b16 %v146
    %v462 = vunpack.c.h.b16 %v146
    %v463 = vunpack.c.l.b16 %v147
    %v464 = vunpack.c.h.b16 %v147
    %v465 = vunpack.c.l.b16 %v148
    %v466 = vunpack.c.h.b16 %v148
    %v467 = vunpack.c.l.b16 %v149
    %v468 = vunpack.c.h.b16 %v149
    %v469 = vunpack.c.l.b16 %v150
    %v470 = vunpack.c.h.b16 %v150
    %v471 = vunpack.c.l.b16 %v151
    %v472 = vunpack.c.h.b16 %v151
    %v473 = vunpack.c.l.b16 %v152
    %v474 = vunpack.c.h.b16 %v152
    %v475 = vunpack.c.l.b16 %v153
    %v476 = vunpack.c.h.b16 %v153
    %v477 = vunpack.c.l.b16 %v154
    %v478 = vunpack.c.h.b16 %v154
    %v479 = vunpack.c.l.b16 %v155
    %v480 = vunpack.c.h.b16 %v155
    %v481 = vunpack.c.l.b16 %v156
    %v482 = vunpack.c.h.b16 %v156
    %v483 = vunpack.c.l.b16 %v157
    %v484 = vunpack.c.h.b16 %v157
    %v485 = vunpack.c.l.b16 %v158
    %v486 = vunpack.c.h.b16 %v158
    %v487 = vunpack.c.l.b16 %v159
    %v488 = vunpack.c.h.b16 %v159
    %v489 = vunpack.c.l.b16 %v160
    %v490 = vunpack.c.h.b16 %v160
    %v491 = vunpack.c.l.b16 %v161
    %v492 = vunpack.c.h.b16 %v161
    %v493 = vunpack.c.l.b16 %v162
    %v494 = vunpack.c.h.b16 %v162
    %v495 = vunpack.c.l.b16 %v163
    %v496 = vunpack.c.h.b16 %v163
    %v497 = vunpack.c.l.b16 %v164
    %v498 = vunpack.c.h.b16 %v164
    %v499 = vunpack.c.l.b16 %v165
    %v500 = vunpack.c.h.b16 %v165
    %v501 = vunpack.c.l.b16 %v166
    %v502 = vunpack.c.h.b16 %v166
    %v503 = vunpack.c.l.b16 %v167
    %v504 = vunpack.c.h.b16 %v167
    %v505 = vunpack.c.l.b16 %v168
    %v506 = vunpack.c.h.b16 %v168
    %v507 = vunpack.c.l.b16 %v169
    %v508 = vunpack.c.h.b16 %v169
    %v509 = vunpack.c.l.b16 %v170
    %v510 = vunpack.c.h.b16 %v170
    %v511 = vunpack.c.l.b16 %v171
    %v512 = vunpack.c.h.b16 %v171
    %v513 = vunpack.c.l.b16 %v172
    %v514 = vunpack.c.h.b16 %v172
    %v515 = vunpack.c.l.b16 %v173
    %v516 = vunpack.c.h.b16 %v173
    %v517 = vunpack.c.l.b16 %v174
    %v518 = vunpack.c.h.b16 %v174
    %v519 = vunpack.c.l.b16 %v175
    %v520 = vunpack.c.h.b16 %v175
    %v521 = vunpack.c.l.b16 %v176
    %v522 = vunpack.c.h.b16 %v176
    %v523 = vunpack.c.l.b16 %v177
    %v524 = vunpack.c.h.b16 %v177
    %v525 = vunpack.c.l.b16 %v178
    %v526 = vunpack.c.h.b16 %v178
    %v527 = vunpack.c.l.b16 %v179
    %v528 = vunpack.c.h.b16 %v179
    %v529 = vunpack.c.l.b16 %v180
    %v530 = vunpack.c.h.b16 %v180
    %v531 = vunpack.c.l.b16 %v181
    %v532 = vunpack.c.h.b16 %v181
    %v533 = vunpack.c.l.b16 %v182
    %v534 = vunpack.c.h.b16 %v182
    %v535 = vunpack.c.l.b16 %v183
    %v536 = vunpack.c.h.b16 %v183
    %v537 = vunpack.c.l.b16 %v184
    %v538 = vunpack.c.h.b16 %v184
    %v539 = vunpack.c.l.b16 %v185
    %v540 = vunpack.c.h.b16 %v185
    %v541 = vunpack.c.l.b16 %v186
    %v542 = vunpack.c.h.b16 %v186
    %v543 = vunpack.c.l.b16 %v187
    %v544 = vunpack.c.h.b16 %v187
    %v545 = vunpack.c.l.b16 %v188
    %v546 = vunpack.c.h.b16 %v188
    %v547 = vunpack.c.l.b16 %v189
    %v548 = vunpack.c.h.b16 %v189
    %v549 = vunpack.c.l.b16 %v190
    %v550 = vunpack.c.h.b16 %v190
    %v551 = vunpack.c.l.b16 %v191
    %v552 = vunpack.c.h.b16 %v191
    %v553 = vpack.c.b16 %v315, %v313
    %v554 = vpack.c.b16 %v316, %v314
    %v555 = vpack.c.b16 %v319, %v317
    %v556 = vpack.c.b16 %v320, %v318
    %v557 = vpack.c.b16 %v323, %v321
    %v558 = vpack.c.b16 %v324, %v322
    %v559 = vpack.c.b16 %v327, %v325
    %v560 = vpack.c.b16 %v328, %v326
    %v561 = vpack.c.b16 %v331, %v329
    %v562 = vpack.c.b16 %v332, %v330
    %v563 = vpack.c.b16 %v335, %v333
    %v564 = vpack.c.b16 %v336, %v334
    %v565 = vpack.c.b16 %v339, %v337
    %v566 = vpack.c.b16 %v340, %v338
    %v567 = vpack.c.b16 %v343, %v341
    %v568 = vpack.c.b16 %v344, %v342
    %v569 = vpack.c.b16 %v347, %v345
    %v570 = vpack.c.b16 %v348, %v346
    %v571 = vpack.c.b16 %v351, %v349
    %v572 = vpack.c.b16 %v352, %v350
    %v573 = vpack.c.b16 %v355, %v353
    %v574 = vpack.c.b16 %v356, %v354
    %v575 = vpack.c.b16 %v359, %v357
    %v576 = vpack.c.b16 %v360, %v358
    %v577 = vpack.c.b16 %v363, %v361
    %v578 = vpack.c.b16 %v364, %v362
    %v579 = vpack.c.b16 %v367, %v365
    %v580 = vpack.c.b16 %v368, %v366
    %v581 = vpack.c.b16 %v371, %v369
    %v582 = vpack.c.b16 %v372, %v370
    %v583 = vpack.c.b16 %v375, %v373
    %v584 = vpack.c.b16 %v376, %v374
    %v585 = vpack.c.b16 %v379, %v377
    %v586 = vpack.c.b16 %v380, %v378
    %v587 = vpack.c.b16 %v383, %v381
    %v588 = vpack.c.b16 %v384, %v382
    %v589 = vpack.c.b16 %v387, %v385
    %v590 = vpack.c.b16 %v388, %v386
    %v591 = vpack.c.b16 %v391, %v389
    %v592 = vpack.c.b16 %v392, %v390
    %v593 = vpack.c.b16 %v395, %v393
    %v594 = vpack.c.b16 %v396, %v394
    %v595 = vpack.c.b16 %v399, %v397
    %v596 = vpack.c.b16 %v400, %v398
    %v597 = vpack.c.b16 %v403, %v401
    %v598 = vpack.c.b16 %v404, %v402
    %v599 = vpack.c.b16 %v407, %v405
    %v600 = vpack.c.b16 %v408, %v406
    %v601 = vpack.c.b16 %v411, %v409
    %v602 = vpack.c.b16 %v412, %v410
    %v603 = vpack.c.b16 %v415, %v413
    %v604 = vpack.c.b16 %v416, %v414
    %v605 = vpack.c.b16 %v419, %v417
    %v606 = vpack.c.b16 %v420, %v418
    %v607 = vpack.c.b16 %v423, %v421
    %v608 = vpack.c.b16 %v424, %v422
    %v609 = vpack.c.b16 %v427, %v425
    %v610 = vpack.c.b16 %v428, %v426
    %v611 = vpack.c.b16 %v431, %v429
    %v612 = vpack.c.b16 %v432, %v430
    %v613 = vpack.c.b16 %v435, %v433
    %v614 = vpack.c.b16 %v436, %v434
    %v615 = vpack.c.b16 %v439, %v437
    %v616 = vpack.c.b16 %v440, %v438
    %v617 = vpack.c.b16 %v443, %v441
    %v618 = vpack.c.b16 %v444, %v442
    %v619 = vpack.c.b16 %v447, %v445
    %v620 = vpack.c.b16 %v448, %v446
    %v621 = vpack.c.b16 %v451, %v449
    %v622 = vpack.c.b16 %v452, %v450
    %v623 = vpack.c.b16 %v455, %v453
    %v624 = vpack.c.b16 %v456, %v454
    %v625 = vpack.c.b16 %v459, %v457
    %v626 = vpack.c.b16 %v460, %v458
    %v627 = vpack.c.b16 %v463, %v461
    %v628 = vpack.c.b16 %v464, %v462
    %v629 = vpack.c.b16 %v467, %v465
    %v630 = vpack.c.b16 %v468, %v466
    %v631 = vpack.c.b16 %v471, %v469
    %v632 = vpack.c.b16 %v472, %v470
    %v633 = vpack.c.b16 %v475, %v473
    %v634 = vpack.c.b16 %v476, %v474
    %v635 = vpack.c.b16 %v479, %v477
    %v636 = vpack.c.b16 %v480, %v478
    %v637 = vpack.c.b16 %v483, %v481
    %v638 = vpack.c.b16 %v484, %v482
    %v639 = vpack.c.b16 %v487, %v485
    %v640 = vpack.c.b16 %v488, %v486
    %v641 = vpack.c.b16 %v491, %v489
    %v642 = vpack.c.b16 %v492, %v490
    %v643 = vpack.c.b16 %v495, %v493
    %v644 = vpack.c.b16 %v496, %v494
    %v645 = vpack.c.b16 %v499, %v497
    %v646 = vpack.c.b16 %v500, %v498
    %v647 = vpack.c.b16 %v503, %v501
    %v648 = vpack.c.b16 %v504, %v502
    %v649 = vpack.c.b16 %v507, %v505
    %v650 = vpack.c.b16 %v508, %v506
    %v651 = vpack.c.b16 %v511, %v509
    %v652 = vpack.c.b16 %v512, %v510
    %v653 = vpack.c.b16 %v515, %v513
    %v654 = vpack.c.b16 %v516, %v514
    %v655 = vpack.c.b16 %v519, %v517
    %v656 = vpack.c.b16 %v520, %v518
    %v657 = vpack.c.b16 %v523, %v521
    %v658 = vpack.c.b16 %v524, %v522
    %v659 = vpack.c.b16 %v527, %v525
    %v660 = vpack.c.b16 %v528, %v526
    %v661 = vpack.c.b16 %v531, %v529
    %v662 = vpack.c.b16 %v532, %v530
    %v663 = vpack.c.b16 %v535, %v533
    %v664 = vpack.c.b16 %v536, %v534
    %v665 = vpack.c.b16 %v539, %v537
    %v666 = vpack.c.b16 %v540, %v538
    %v667 = vpack.c.b16 %v543, %v541
    %v668 = vpack.c.b16 %v544, %v542
    %v669 = vpack.c.b16 %v547, %v545
    %v670 = vpack.c.b16 %v548, %v546
    %v671 = vpack.c.b16 %v551, %v549
    %v672 = vpack.c.b16 %v552, %v550
    %v794 = vlaneseq
    %v795 = vshrl.u32 %v794, 7
    %v796 = vsub.s32 0, %v795
    %v797 = vrot.slane %v192, %v796
    %v798 = vlaneseq
    %v799 = vshrl.u32 %v798, 7
    %v800 = vsub.s32 1, %v799
    %v801 = vrot.slane %v192, %v800
    %vm804 = vcmask 523264
    %v806 = vsel %vm804, %v71, 0
    %808 = vmatprep.subr.bf16.mxu0 %v554
    %809 = vmatpush1.bf16.msra.mxu0 %v553
    %810 = vmatprep.subr.bf16.mxu0 %v556
    %811 = vmatpush1.bf16.msra.mxu0 %v555
    %812 = vmatprep.subr.bf16.mxu0 %v558
    %813 = vmatpush1.bf16.msra.mxu0 %v557
    %814 = vmatprep.subr.bf16.mxu0 %v560
    %815 = vmatpush1.bf16.msra.mxu0 %v559
    %816 = vmatprep.subr.bf16.mxu0 %v562
    %817 = vmatpush1.bf16.msra.mxu0 %v561
    %818 = vmatprep.subr.bf16.mxu0 %v564
    %819 = vmatpush1.bf16.msra.mxu0 %v563
    %820 = vmatprep.subr.bf16.mxu0 %v566
    %821 = vmatpush1.bf16.msra.mxu0 %v565
    %822 = vmatprep.subr.bf16.mxu0 %v568
    %823 = vmatpush1.bf16.msra.mxu0 %v567
    %824 = vmatprep.subr.bf16.mxu0 %v570
    %825 = vmatpush1.bf16.msra.mxu0 %v569
    %826 = vmatprep.subr.bf16.mxu0 %v572
    %827 = vmatpush1.bf16.msra.mxu0 %v571
    %828 = vmatprep.subr.bf16.mxu0 %v574
    %829 = vmatpush1.bf16.msra.mxu0 %v573
    %830 = vmatprep.subr.bf16.mxu0 %v576
    %831 = vmatpush1.bf16.msra.mxu0 %v575
    %832 = vmatprep.subr.bf16.mxu0 %v578
    %833 = vmatpush1.bf16.msra.mxu0 %v577
    %834 = vmatprep.subr.bf16.mxu0 %v580
    %835 = vmatpush1.bf16.msra.mxu0 %v579
    %836 = vmatprep.subr.bf16.mxu0 %v582
    %837 = vmatpush1.bf16.msra.mxu0 %v581
    %838 = vmatprep.subr.bf16.mxu0 %v584
    %839 = vmatpush1.bf16.msra.mxu0 %v583
    %840 = vmatprep.mubr.bf16.mxu0 %v65
    %841 = vmatmul.mubr.bf16.gmra.mrb[0].mxu0 %v64
    %v842 = vpop.f32.mrb[0].mxu0
    %v843 = vadd.f32 %v797, %v842
    %v844 = vpop.f32.mrb[0].mxu0
    %v845 = vadd.f32 %v801, %v844
    %v846 = vpop.f32.mrb[0].mxu0
    %v847 = vpop.f32.mrb[0].mxu0
    %848 = vdwg.mxu0
    %849 = vmatprep.subr.bf16.mxu0 %v586
    %850 = vmatpush1.bf16.msra.mxu0 %v585
    %851 = vmatprep.subr.bf16.mxu0 %v588
    %852 = vmatpush1.bf16.msra.mxu0 %v587
    %853 = vmatprep.subr.bf16.mxu0 %v590
    %854 = vmatpush1.bf16.msra.mxu0 %v589
    %855 = vmatprep.subr.bf16.mxu0 %v592
    %856 = vmatpush1.bf16.msra.mxu0 %v591
    %857 = vmatprep.subr.bf16.mxu0 %v594
    %858 = vmatpush1.bf16.msra.mxu0 %v593
    %859 = vmatprep.subr.bf16.mxu0 %v596
    %860 = vmatpush1.bf16.msra.mxu0 %v595
    %861 = vmatprep.subr.bf16.mxu0 %v598
    %862 = vmatpush1.bf16.msra.mxu0 %v597
    %863 = vmatprep.subr.bf16.mxu0 %v600
    %864 = vmatpush1.bf16.msra.mxu0 %v599
    %865 = vmatprep.subr.bf16.mxu0 %v602
    %866 = vmatpush1.bf16.msra.mxu0 %v601
    %867 = vmatprep.subr.bf16.mxu0 %v604
    %868 = vmatpush1.bf16.msra.mxu0 %v603
    %869 = vmatprep.subr.bf16.mxu0 %v606
    %870 = vmatpush1.bf16.msra.mxu0 %v605
    %871 = vmatprep.subr.bf16.mxu0 %v608
    %872 = vmatpush1.bf16.msra.mxu0 %v607
    %873 = vmatprep.subr.bf16.mxu0 %v610
    %874 = vmatpush1.bf16.msra.mxu0 %v609
    %875 = vmatprep.subr.bf16.mxu0 %v612
    %876 = vmatpush1.bf16.msra.mxu0 %v611
    %877 = vmatprep.subr.bf16.mxu0 %v614
    %878 = vmatpush1.bf16.msra.mxu0 %v613
    %879 = vmatprep.subr.bf16.mxu0 %v616
    %880 = vmatpush1.bf16.msra.mxu0 %v615
    %881 = vmatprep.mubr.bf16.mxu0 %v67
    %882 = vmatmul.mubr.bf16.gmra.mrb[0].mxu0 %v66
    %v883 = vpop.f32.mrb[0].mxu0
    %v884 = vadd.f32 %v843, %v883
    %v885 = vpop.f32.mrb[0].mxu0
    %v886 = vadd.f32 %v845, %v885
    %v887 = vpop.f32.mrb[0].mxu0
    %v888 = vpop.f32.mrb[0].mxu0
    %889 = vdwg.mxu0
    %890 = vmatprep.subr.bf16.mxu0 %v618
    %891 = vmatpush1.bf16.msra.mxu0 %v617
    %892 = vmatprep.subr.bf16.mxu0 %v620
    %893 = vmatpush1.bf16.msra.mxu0 %v619
    %894 = vmatprep.subr.bf16.mxu0 %v622
    %895 = vmatpush1.bf16.msra.mxu0 %v621
    %896 = vmatprep.subr.bf16.mxu0 %v624
    %897 = vmatpush1.bf16.msra.mxu0 %v623
    %898 = vmatprep.subr.bf16.mxu0 %v626
    %899 = vmatpush1.bf16.msra.mxu0 %v625
    %900 = vmatprep.subr.bf16.mxu0 %v628
    %901 = vmatpush1.bf16.msra.mxu0 %v627
    %902 = vmatprep.subr.bf16.mxu0 %v630
    %903 = vmatpush1.bf16.msra.mxu0 %v629
    %904 = vmatprep.subr.bf16.mxu0 %v632
    %905 = vmatpush1.bf16.msra.mxu0 %v631
    %906 = vmatprep.subr.bf16.mxu0 %v634
    %907 = vmatpush1.bf16.msra.mxu0 %v633
    %908 = vmatprep.subr.bf16.mxu0 %v636
    %909 = vmatpush1.bf16.msra.mxu0 %v635
    %910 = vmatprep.subr.bf16.mxu0 %v638
    %911 = vmatpush1.bf16.msra.mxu0 %v637
    %912 = vmatprep.subr.bf16.mxu0 %v640
    %913 = vmatpush1.bf16.msra.mxu0 %v639
    %914 = vmatprep.subr.bf16.mxu0 %v642
    %915 = vmatpush1.bf16.msra.mxu0 %v641
    %916 = vmatprep.subr.bf16.mxu0 %v644
    %917 = vmatpush1.bf16.msra.mxu0 %v643
    %918 = vmatprep.subr.bf16.mxu0 %v646
    %919 = vmatpush1.bf16.msra.mxu0 %v645
    %920 = vmatprep.subr.bf16.mxu0 %v648
    %921 = vmatpush1.bf16.msra.mxu0 %v647
    %922 = vmatprep.mubr.bf16.mxu0 %v69
    %923 = vmatmul.mubr.bf16.gmra.mrb[0].mxu0 %v68
    %v924 = vpop.f32.mrb[0].mxu0
    %v925 = vadd.f32 %v884, %v924
    %v926 = vpop.f32.mrb[0].mxu0
    %v927 = vadd.f32 %v886, %v926
    %v928 = vpop.f32.mrb[0].mxu0
    %v929 = vpop.f32.mrb[0].mxu0
    %930 = vdwg.mxu0
    %931 = vmatprep.subr.bf16.mxu0 %v650
    %932 = vmatpush1.bf16.msra.mxu0 %v649
    %933 = vmatprep.subr.bf16.mxu0 %v652
    %934 = vmatpush1.bf16.msra.mxu0 %v651
    %935 = vmatprep.subr.bf16.mxu0 %v654
    %936 = vmatpush1.bf16.msra.mxu0 %v653
    %937 = vmatprep.subr.bf16.mxu0 %v656
    %938 = vmatpush1.bf16.msra.mxu0 %v655
    %939 = vmatprep.subr.bf16.mxu0 %v658
    %940 = vmatpush1.bf16.msra.mxu0 %v657
    %941 = vmatprep.subr.bf16.mxu0 %v660
    %942 = vmatpush1.bf16.msra.mxu0 %v659
    %943 = vmatprep.subr.bf16.mxu0 %v662
    %944 = vmatpush1.bf16.msra.mxu0 %v661
    %945 = vmatprep.subr.bf16.mxu0 %v664
    %946 = vmatpush1.bf16.msra.mxu0 %v663
    %947 = vmatprep.subr.bf16.mxu0 %v666
    %948 = vmatpush1.bf16.msra.mxu0 %v665
    %949 = vmatprep.subr.bf16.mxu0 %v668
    %950 = vmatpush1.bf16.msra.mxu0 %v667
    %951 = vmatprep.subr.bf16.mxu0 %v670
    %952 = vmatpush1.bf16.msra.mxu0 %v669
    %953 = vmatprep.subr.bf16.mxu0 %v672
    %954 = vmatpush1.bf16.msra.mxu0 %v671
    %955 = vmatprep.subr.bf16.mxu0 0
    %956 = vmatpush1.bf16.msra.mxu0 0
    %957 = vmatprep.subr.bf16.mxu0 0
    %958 = vmatpush1.bf16.msra.mxu0 0
    %959 = vmatprep.subr.bf16.mxu0 0
    %960 = vmatpush1.bf16.msra.mxu0 0
    %961 = vmatprep.subr.bf16.mxu0 0
    %962 = vmatpush1.bf16.msra.mxu0 0
    %963 = vmatprep.mubr.bf16.mxu0 %v806
    %964 = vmatmul.mubr.bf16.gmra.mrb[0].mxu0 %v70
    %v965 = vpop.f32.mrb[0].mxu0
    %v966 = vadd.f32 %v925, %v965
    %v967 = vpop.f32.mrb[0].mxu0
    %v968 = vadd.f32 %v927, %v967
    %v969 = vpop.f32.mrb[0].mxu0
    %v970 = vpop.f32.mrb[0].mxu0
    %971 = vdwg.mxu0
    %v972 = vmax.f32 %v966, 0.0
    %v973 = vmax.f32 %v968, 0.0
    %v974 = vpack.c.bf16 %v972, %v972
    %v975 = vpack.c.bf16 %v973, %v973
    %v976 = vld [vmem:[%s3] sm:$0xff]
    %v977 = vld [vmem:[%s3 + $0x8] sm:$0xff]
    %v978 = vld [vmem:[%s3 + $0x10] sm:$0xff]
    %v979 = vld [vmem:[%s3 + $0x18] sm:$0xff]
    %v980 = vld [vmem:[%s3 + $0x20] sm:$0xff]
    %v981 = vld [vmem:[%s3 + $0x28] sm:$0xff]
    %v982 = vld [vmem:[%s3 + $0x30] sm:$0xff]
    %v983 = vld [vmem:[%s3 + $0x38] sm:$0xff]
    %v984 = vld [vmem:[%s3 + $0x40] sm:$0xff]
    %v985 = vld [vmem:[%s3 + $0x48] sm:$0xff]
    %v986 = vld [vmem:[%s3 + $0x50] sm:$0xff]
    %v987 = vld [vmem:[%s3 + $0x58] sm:$0xff]
    %v988 = vld [vmem:[%s3 + $0x60] sm:$0xff]
    %v989 = vld [vmem:[%s3 + $0x68] sm:$0xff]
    %v990 = vld [vmem:[%s3 + $0x70] sm:$0xff]
    %v991 = vld [vmem:[%s3 + $0x78] sm:$0xff]
    %v992 = vld [vmem:[%s3 + $0x80] sm:$0xff]
    %v993 = vld [vmem:[%s3 + $0x88] sm:$0xff]
    %v994 = vld [vmem:[%s3 + $0x90] sm:$0xff]
    %v995 = vld [vmem:[%s3 + $0x98] sm:$0xff]
    %v996 = vld [vmem:[%s3 + $0xa0] sm:$0xff]
    %v997 = vld [vmem:[%s3 + $0xa8] sm:$0xff]
    %v998 = vld [vmem:[%s3 + $0xb0] sm:$0xff]
    %v999 = vld [vmem:[%s3 + $0xb8] sm:$0xff]
    %v1000 = vld [vmem:[%s3 + $0xc0] sm:$0xff]
    %v1001 = vld [vmem:[%s3 + $0xc8] sm:$0xff]
    %v1002 = vld [vmem:[%s3 + $0xd0] sm:$0xff]
    %v1003 = vld [vmem:[%s3 + $0xd8] sm:$0xff]
    %v1004 = vld [vmem:[%s3 + $0xe0] sm:$0xff]
    %v1005 = vld [vmem:[%s3 + $0xe8] sm:$0xff]
    %v1006 = vld [vmem:[%s3 + $0xf0] sm:$0xff]
    %v1007 = vld [vmem:[%s3 + $0xf8] sm:$0xff]
    %v1008 = vld [vmem:[%s3 + $0x100] sm:$0xff]
    %v1009 = vld [vmem:[%s3 + $0x108] sm:$0xff]
    %v1010 = vld [vmem:[%s3 + $0x110] sm:$0xff]
    %v1011 = vld [vmem:[%s3 + $0x118] sm:$0xff]
    %v1012 = vld [vmem:[%s3 + $0x120] sm:$0xff]
    %v1013 = vld [vmem:[%s3 + $0x128] sm:$0xff]
    %v1014 = vld [vmem:[%s3 + $0x130] sm:$0xff]
    %v1015 = vld [vmem:[%s3 + $0x138] sm:$0xff]
    %v1016 = vld [vmem:[%s3 + $0x140] sm:$0xff]
    %v1017 = vld [vmem:[%s3 + $0x148] sm:$0xff]
    %v1018 = vld [vmem:[%s3 + $0x150] sm:$0xff]
    %v1019 = vld [vmem:[%s3 + $0x158] sm:$0xff]
    %v1020 = vld [vmem:[%s3 + $0x160] sm:$0xff]
    %v1021 = vld [vmem:[%s3 + $0x168] sm:$0xff]
    %v1022 = vld [vmem:[%s3 + $0x170] sm:$0xff]
    %v1023 = vld [vmem:[%s3 + $0x178] sm:$0xff]
    %v1024 = vld [vmem:[%s3 + $0x180] sm:$0xff]
    %v1025 = vld [vmem:[%s3 + $0x188] sm:$0xff]
    %v1026 = vld [vmem:[%s3 + $0x190] sm:$0xff]
    %v1027 = vld [vmem:[%s3 + $0x198] sm:$0xff]
    %v1028 = vld [vmem:[%s3 + $0x1a0] sm:$0xff]
    %v1029 = vld [vmem:[%s3 + $0x1a8] sm:$0xff]
    %v1030 = vld [vmem:[%s3 + $0x1b0] sm:$0xff]
    %v1031 = vld [vmem:[%s3 + $0x1b8] sm:$0xff]
    %v1032 = vld [vmem:[%s3 + $0x1c0] sm:$0xff]
    %v1033 = vld [vmem:[%s3 + $0x1c8] sm:$0xff]
    %v1034 = vld [vmem:[%s3 + $0x1d0] sm:$0xff]
    %v1035 = vld [vmem:[%s3 + $0x1d8] sm:$0xff]
    %v1036 = vld [vmem:[%s3 + $0x1e0] sm:$0xff]
    %v1037 = vld [vmem:[%s3 + $0x1e8] sm:$0xff]
    %v1038 = vld [vmem:[%s3 + $0x1f0] sm:$0xff]
    %v1039 = vld [vmem:[%s3 + $0x1f8] sm:$0xff]
    %v1040 = vld [vmem:[%s3 + $0x200] sm:$0xff]
    %v1041 = vld [vmem:[%s3 + $0x208] sm:$0xff]
    %v1042 = vld [vmem:[%s3 + $0x210] sm:$0xff]
    %v1043 = vld [vmem:[%s3 + $0x218] sm:$0xff]
    %v1044 = vld [vmem:[%s3 + $0x220] sm:$0xff]
    %v1045 = vld [vmem:[%s3 + $0x228] sm:$0xff]
    %v1046 = vld [vmem:[%s3 + $0x230] sm:$0xff]
    %v1047 = vld [vmem:[%s3 + $0x238] sm:$0xff]
    %v1048 = vld [vmem:[%s3 + $0x240] sm:$0xff]
    %v1049 = vld [vmem:[%s3 + $0x248] sm:$0xff]
    %v1050 = vld [vmem:[%s3 + $0x250] sm:$0xff]
    %v1051 = vld [vmem:[%s3 + $0x258] sm:$0xff]
    %v1052 = vld [vmem:[%s3 + $0x260] sm:$0xff]
    %v1053 = vld [vmem:[%s3 + $0x268] sm:$0xff]
    %v1054 = vld [vmem:[%s3 + $0x270] sm:$0xff]
    %v1055 = vld [vmem:[%s3 + $0x278] sm:$0xff]
    %v1056 = vld [vmem:[%s3 + $0x280] sm:$0xff]
    %v1057 = vld [vmem:[%s3 + $0x288] sm:$0xff]
    %v1058 = vld [vmem:[%s3 + $0x290] sm:$0xff]
    %v1059 = vld [vmem:[%s3 + $0x298] sm:$0xff]
    %v1060 = vld [vmem:[%s3 + $0x2a0] sm:$0xff]
    %v1061 = vld [vmem:[%s3 + $0x2a8] sm:$0xff]
    %v1062 = vld [vmem:[%s3 + $0x2b0] sm:$0xff]
    %v1063 = vld [vmem:[%s3 + $0x2b8] sm:$0xff]
    %v1064 = vld [vmem:[%s3 + $0x2c0] sm:$0xff]
    %v1065 = vld [vmem:[%s3 + $0x2c8] sm:$0xff]
    %v1066 = vld [vmem:[%s3 + $0x2d0] sm:$0xff]
    %v1067 = vld [vmem:[%s3 + $0x2d8] sm:$0xff]
    %v1068 = vld [vmem:[%s3 + $0x2e0] sm:$0xff]
    %v1069 = vld [vmem:[%s3 + $0x2e8] sm:$0xff]
    %v1070 = vld [vmem:[%s3 + $0x2f0] sm:$0xff]
    %v1071 = vld [vmem:[%s3 + $0x2f8] sm:$0xff]
    %v1072 = vld [vmem:[%s3 + $0x300] sm:$0xff]
    %v1073 = vld [vmem:[%s3 + $0x308] sm:$0xff]
    %v1074 = vld [vmem:[%s3 + $0x310] sm:$0xff]
    %v1075 = vld [vmem:[%s3 + $0x318] sm:$0xff]
    %v1076 = vld [vmem:[%s3 + $0x320] sm:$0xff]
    %v1077 = vld [vmem:[%s3 + $0x328] sm:$0xff]
    %v1078 = vld [vmem:[%s3 + $0x330] sm:$0xff]
    %v1079 = vld [vmem:[%s3 + $0x338] sm:$0xff]
    %v1080 = vld [vmem:[%s3 + $0x340] sm:$0xff]
    %v1081 = vld [vmem:[%s3 + $0x348] sm:$0xff]
    %v1082 = vld [vmem:[%s3 + $0x350] sm:$0xff]
    %v1083 = vld [vmem:[%s3 + $0x358] sm:$0xff]
    %v1084 = vld [vmem:[%s3 + $0x360] sm:$0xff]
    %v1085 = vld [vmem:[%s3 + $0x368] sm:$0xff]
    %v1086 = vld [vmem:[%s3 + $0x370] sm:$0xff]
    %v1087 = vld [vmem:[%s3 + $0x378] sm:$0xff]
    %v1088 = vld [vmem:[%s3 + $0x380] sm:$0xff]
    %v1089 = vld [vmem:[%s3 + $0x388] sm:$0xff]
    %v1090 = vld [vmem:[%s3 + $0x390] sm:$0xff]
    %v1091 = vld [vmem:[%s3 + $0x398] sm:$0xff]
    %v1092 = vld [vmem:[%s3 + $0x3a0] sm:$0xff]
    %v1093 = vld [vmem:[%s3 + $0x3a8] sm:$0xff]
    %v1094 = vld [vmem:[%s3 + $0x3b0] sm:$0xff]
    %v1095 = vld [vmem:[%s3 + $0x3b8] sm:$0xff]
    %v1096 = vld [vmem:[%s3 + $0x3c0] sm:$0xff]
    %v1097 = vld [vmem:[%s3 + $0x3c8] sm:$0xff]
    %v1098 = vld [vmem:[%s3 + $0x3d0] sm:$0xff]
    %v1099 = vld [vmem:[%s3 + $0x3d8] sm:$0xff]
    %v1100 = vld [vmem:[%s3 + $0x3e0] sm:$0xff]
    %v1101 = vld [vmem:[%s3 + $0x3e8] sm:$0xff]
    %v1102 = vld [vmem:[%s3 + $0x3f0] sm:$0xff]
    %v1103 = vld [vmem:[%s3 + $0x3f8] sm:$0xff]
    %v1104 = vld [vmem:[%s4] sm:$0xff]
    %v1233 = vunpack.c.l.b16 %v976
    %v1234 = vunpack.c.h.b16 %v976
    %v1235 = vunpack.c.l.b16 %v977
    %v1236 = vunpack.c.h.b16 %v977
    %v1237 = vunpack.c.l.b16 %v978
    %v1238 = vunpack.c.h.b16 %v978
    %v1239 = vunpack.c.l.b16 %v979
    %v1240 = vunpack.c.h.b16 %v979
    %v1241 = vunpack.c.l.b16 %v980
    %v1242 = vunpack.c.h.b16 %v980
    %v1243 = vunpack.c.l.b16 %v981
    %v1244 = vunpack.c.h.b16 %v981
    %v1245 = vunpack.c.l.b16 %v982
    %v1246 = vunpack.c.h.b16 %v982
    %v1247 = vunpack.c.l.b16 %v983
    %v1248 = vunpack.c.h.b16 %v983
    %v1249 = vunpack.c.l.b16 %v984
    %v1250 = vunpack.c.h.b16 %v984
    %v1251 = vunpack.c.l.b16 %v985
    %v1252 = vunpack.c.h.b16 %v985
    %v1253 = vunpack.c.l.b16 %v986
    %v1254 = vunpack.c.h.b16 %v986
    %v1255 = vunpack.c.l.b16 %v987
    %v1256 = vunpack.c.h.b16 %v987
    %v1257 = vunpack.c.l.b16 %v988
    %v1258 = vunpack.c.h.b16 %v988
    %v1259 = vunpack.c.l.b16 %v989
    %v1260 = vunpack.c.h.b16 %v989
    %v1261 = vunpack.c.l.b16 %v990
    %v1262 = vunpack.c.h.b16 %v990
    %v1263 = vunpack.c.l.b16 %v991
    %v1264 = vunpack.c.h.b16 %v991
    %v1265 = vunpack.c.l.b16 %v992
    %v1266 = vunpack.c.h.b16 %v992
    %v1267 = vunpack.c.l.b16 %v993
    %v1268 = vunpack.c.h.b16 %v993
    %v1269 = vunpack.c.l.b16 %v994
    %v1270 = vunpack.c.h.b16 %v994
    %v1271 = vunpack.c.l.b16 %v995
    %v1272 = vunpack.c.h.b16 %v995
    %v1273 = vunpack.c.l.b16 %v996
    %v1274 = vunpack.c.h.b16 %v996
    %v1275 = vunpack.c.l.b16 %v997
    %v1276 = vunpack.c.h.b16 %v997
    %v1277 = vunpack.c.l.b16 %v998
    %v1278 = vunpack.c.h.b16 %v998
    %v1279 = vunpack.c.l.b16 %v999
    %v1280 = vunpack.c.h.b16 %v999
    %v1281 = vunpack.c.l.b16 %v1000
    %v1282 = vunpack.c.h.b16 %v1000
    %v1283 = vunpack.c.l.b16 %v1001
    %v1284 = vunpack.c.h.b16 %v1001
    %v1285 = vunpack.c.l.b16 %v1002
    %v1286 = vunpack.c.h.b16 %v1002
    %v1287 = vunpack.c.l.b16 %v1003
    %v1288 = vunpack.c.h.b16 %v1003
    %v1289 = vunpack.c.l.b16 %v1004
    %v1290 = vunpack.c.h.b16 %v1004
    %v1291 = vunpack.c.l.b16 %v1005
    %v1292 = vunpack.c.h.b16 %v1005
    %v1293 = vunpack.c.l.b16 %v1006
    %v1294 = vunpack.c.h.b16 %v1006
    %v1295 = vunpack.c.l.b16 %v1007
    %v1296 = vunpack.c.h.b16 %v1007
    %v1297 = vunpack.c.l.b16 %v1008
    %v1298 = vunpack.c.h.b16 %v1008
    %v1299 = vunpack.c.l.b16 %v1009
    %v1300 = vunpack.c.h.b16 %v1009
    %v1301 = vunpack.c.l.b16 %v1010
    %v1302 = vunpack.c.h.b16 %v1010
    %v1303 = vunpack.c.l.b16 %v1011
    %v1304 = vunpack.c.h.b16 %v1011
    %v1305 = vunpack.c.l.b16 %v1012
    %v1306 = vunpack.c.h.b16 %v1012
    %v1307 = vunpack.c.l.b16 %v1013
    %v1308 = vunpack.c.h.b16 %v1013
    %v1309 = vunpack.c.l.b16 %v1014
    %v1310 = vunpack.c.h.b16 %v1014
    %v1311 = vunpack.c.l.b16 %v1015
    %v1312 = vunpack.c.h.b16 %v1015
    %v1313 = vunpack.c.l.b16 %v1016
    %v1314 = vunpack.c.h.b16 %v1016
    %v1315 = vunpack.c.l.b16 %v1017
    %v1316 = vunpack.c.h.b16 %v1017
    %v1317 = vunpack.c.l.b16 %v1018
    %v1318 = vunpack.c.h.b16 %v1018
    %v1319 = vunpack.c.l.b16 %v1019
    %v1320 = vunpack.c.h.b16 %v1019
    %v1321 = vunpack.c.l.b16 %v1020
    %v1322 = vunpack.c.h.b16 %v1020
    %v1323 = vunpack.c.l.b16 %v1021
    %v1324 = vunpack.c.h.b16 %v1021
    %v1325 = vunpack.c.l.b16 %v1022
    %v1326 = vunpack.c.h.b16 %v1022
    %v1327 = vunpack.c.l.b16 %v1023
    %v1328 = vunpack.c.h.b16 %v1023
    %v1329 = vunpack.c.l.b16 %v1024
    %v1330 = vunpack.c.h.b16 %v1024
    %v1331 = vunpack.c.l.b16 %v1025
    %v1332 = vunpack.c.h.b16 %v1025
    %v1333 = vunpack.c.l.b16 %v1026
    %v1334 = vunpack.c.h.b16 %v1026
    %v1335 = vunpack.c.l.b16 %v1027
    %v1336 = vunpack.c.h.b16 %v1027
    %v1337 = vunpack.c.l.b16 %v1028
    %v1338 = vunpack.c.h.b16 %v1028
    %v1339 = vunpack.c.l.b16 %v1029
    %v1340 = vunpack.c.h.b16 %v1029
    %v1341 = vunpack.c.l.b16 %v1030
    %v1342 = vunpack.c.h.b16 %v1030
    %v1343 = vunpack.c.l.b16 %v1031
    %v1344 = vunpack.c.h.b16 %v1031
    %v1345 = vunpack.c.l.b16 %v1032
    %v1346 = vunpack.c.h.b16 %v1032
    %v1347 = vunpack.c.l.b16 %v1033
    %v1348 = vunpack.c.h.b16 %v1033
    %v1349 = vunpack.c.l.b16 %v1034
    %v1350 = vunpack.c.h.b16 %v1034
    %v1351 = vunpack.c.l.b16 %v1035
    %v1352 = vunpack.c.h.b16 %v1035
    %v1353 = vunpack.c.l.b16 %v1036
    %v1354 = vunpack.c.h.b16 %v1036
    %v1355 = vunpack.c.l.b16 %v1037
    %v1356 = vunpack.c.h.b16 %v1037
    %v1357 = vunpack.c.l.b16 %v1038
    %v1358 = vunpack.c.h.b16 %v1038
    %v1359 = vunpack.c.l.b16 %v1039
    %v1360 = vunpack.c.h.b16 %v1039
    %v1361 = vunpack.c.l.b16 %v1040
    %v1362 = vunpack.c.h.b16 %v1040
    %v1363 = vunpack.c.l.b16 %v1041
    %v1364 = vunpack.c.h.b16 %v1041
    %v1365 = vunpack.c.l.b16 %v1042
    %v1366 = vunpack.c.h.b16 %v1042
    %v1367 = vunpack.c.l.b16 %v1043
    %v1368 = vunpack.c.h.b16 %v1043
    %v1369 = vunpack.c.l.b16 %v1044
    %v1370 = vunpack.c.h.b16 %v1044
    %v1371 = vunpack.c.l.b16 %v1045
    %v1372 = vunpack.c.h.b16 %v1045
    %v1373 = vunpack.c.l.b16 %v1046
    %v1374 = vunpack.c.h.b16 %v1046
    %v1375 = vunpack.c.l.b16 %v1047
    %v1376 = vunpack.c.h.b16 %v1047
    %v1377 = vunpack.c.l.b16 %v1048
    %v1378 = vunpack.c.h.b16 %v1048
    %v1379 = vunpack.c.l.b16 %v1049
    %v1380 = vunpack.c.h.b16 %v1049
    %v1381 = vunpack.c.l.b16 %v1050
    %v1382 = vunpack.c.h.b16 %v1050
    %v1383 = vunpack.c.l.b16 %v1051
    %v1384 = vunpack.c.h.b16 %v1051
    %v1385 = vunpack.c.l.b16 %v1052
    %v1386 = vunpack.c.h.b16 %v1052
    %v1387 = vunpack.c.l.b16 %v1053
    %v1388 = vunpack.c.h.b16 %v1053
    %v1389 = vunpack.c.l.b16 %v1054
    %v1390 = vunpack.c.h.b16 %v1054
    %v1391 = vunpack.c.l.b16 %v1055
    %v1392 = vunpack.c.h.b16 %v1055
    %v1393 = vunpack.c.l.b16 %v1056
    %v1394 = vunpack.c.h.b16 %v1056
    %v1395 = vunpack.c.l.b16 %v1057
    %v1396 = vunpack.c.h.b16 %v1057
    %v1397 = vunpack.c.l.b16 %v1058
    %v1398 = vunpack.c.h.b16 %v1058
    %v1399 = vunpack.c.l.b16 %v1059
    %v1400 = vunpack.c.h.b16 %v1059
    %v1401 = vunpack.c.l.b16 %v1060
    %v1402 = vunpack.c.h.b16 %v1060
    %v1403 = vunpack.c.l.b16 %v1061
    %v1404 = vunpack.c.h.b16 %v1061
    %v1405 = vunpack.c.l.b16 %v1062
    %v1406 = vunpack.c.h.b16 %v1062
    %v1407 = vunpack.c.l.b16 %v1063
    %v1408 = vunpack.c.h.b16 %v1063
    %v1409 = vunpack.c.l.b16 %v1064
    %v1410 = vunpack.c.h.b16 %v1064
    %v1411 = vunpack.c.l.b16 %v1065
    %v1412 = vunpack.c.h.b16 %v1065
    %v1413 = vunpack.c.l.b16 %v1066
    %v1414 = vunpack.c.h.b16 %v1066
    %v1415 = vunpack.c.l.b16 %v1067
    %v1416 = vunpack.c.h.b16 %v1067
    %v1417 = vunpack.c.l.b16 %v1068
    %v1418 = vunpack.c.h.b16 %v1068
    %v1419 = vunpack.c.l.b16 %v1069
    %v1420 = vunpack.c.h.b16 %v1069
    %v1421 = vunpack.c.l.b16 %v1070
    %v1422 = vunpack.c.h.b16 %v1070
    %v1423 = vunpack.c.l.b16 %v1071
    %v1424 = vunpack.c.h.b16 %v1071
    %v1425 = vunpack.c.l.b16 %v1072
    %v1426 = vunpack.c.h.b16 %v1072
    %v1427 = vunpack.c.l.b16 %v1073
    %v1428 = vunpack.c.h.b16 %v1073
    %v1429 = vunpack.c.l.b16 %v1074
    %v1430 = vunpack.c.h.b16 %v1074
    %v1431 = vunpack.c.l.b16 %v1075
    %v1432 = vunpack.c.h.b16 %v1075
    %v1433 = vunpack.c.l.b16 %v1076
    %v1434 = vunpack.c.h.b16 %v1076
    %v1435 = vunpack.c.l.b16 %v1077
    %v1436 = vunpack.c.h.b16 %v1077
    %v1437 = vunpack.c.l.b16 %v1078
    %v1438 = vunpack.c.h.b16 %v1078
    %v1439 = vunpack.c.l.b16 %v1079
    %v1440 = vunpack.c.h.b16 %v1079
    %v1441 = vunpack.c.l.b16 %v1080
    %v1442 = vunpack.c.h.b16 %v1080
    %v1443 = vunpack.c.l.b16 %v1081
    %v1444 = vunpack.c.h.b16 %v1081
    %v1445 = vunpack.c.l.b16 %v1082
    %v1446 = vunpack.c.h.b16 %v1082
    %v1447 = vunpack.c.l.b16 %v1083
    %v1448 = vunpack.c.h.b16 %v1083
    %v1449 = vunpack.c.l.b16 %v1084
    %v1450 = vunpack.c.h.b16 %v1084
    %v1451 = vunpack.c.l.b16 %v1085
    %v1452 = vunpack.c.h.b16 %v1085
    %v1453 = vunpack.c.l.b16 %v1086
    %v1454 = vunpack.c.h.b16 %v1086
    %v1455 = vunpack.c.l.b16 %v1087
    %v1456 = vunpack.c.h.b16 %v1087
    %v1457 = vunpack.c.l.b16 %v1088
    %v1458 = vunpack.c.h.b16 %v1088
    %v1459 = vunpack.c.l.b16 %v1089
    %v1460 = vunpack.c.h.b16 %v1089
    %v1461 = vunpack.c.l.b16 %v1090
    %v1462 = vunpack.c.h.b16 %v1090
    %v1463 = vunpack.c.l.b16 %v1091
    %v1464 = vunpack.c.h.b16 %v1091
    %v1465 = vunpack.c.l.b16 %v1092
    %v1466 = vunpack.c.h.b16 %v1092
    %v1467 = vunpack.c.l.b16 %v1093
    %v1468 = vunpack.c.h.b16 %v1093
    %v1469 = vunpack.c.l.b16 %v1094
    %v1470 = vunpack.c.h.b16 %v1094
    %v1471 = vunpack.c.l.b16 %v1095
    %v1472 = vunpack.c.h.b16 %v1095
    %v1473 = vunpack.c.l.b16 %v1096
    %v1474 = vunpack.c.h.b16 %v1096
    %v1475 = vunpack.c.l.b16 %v1097
    %v1476 = vunpack.c.h.b16 %v1097
    %v1477 = vunpack.c.l.b16 %v1098
    %v1478 = vunpack.c.h.b16 %v1098
    %v1479 = vunpack.c.l.b16 %v1099
    %v1480 = vunpack.c.h.b16 %v1099
    %v1481 = vunpack.c.l.b16 %v1100
    %v1482 = vunpack.c.h.b16 %v1100
    %v1483 = vunpack.c.l.b16 %v1101
    %v1484 = vunpack.c.h.b16 %v1101
    %v1485 = vunpack.c.l.b16 %v1102
    %v1486 = vunpack.c.h.b16 %v1102
    %v1487 = vunpack.c.l.b16 %v1103
    %v1488 = vunpack.c.h.b16 %v1103
    %v1489 = vpack.c.b16 %v1241, %v1233
    %v1490 = vpack.c.b16 %v1242, %v1234
    %v1491 = vpack.c.b16 %v1243, %v1235
    %v1492 = vpack.c.b16 %v1244, %v1236
    %v1493 = vpack.c.b16 %v1245, %v1237
    %v1494 = vpack.c.b16 %v1246, %v1238
    %v1495 = vpack.c.b16 %v1247, %v1239
    %v1496 = vpack.c.b16 %v1248, %v1240
    %v1497 = vpack.c.b16 %v1257, %v1249
    %v1498 = vpack.c.b16 %v1258, %v1250
    %v1499 = vpack.c.b16 %v1259, %v1251
    %v1500 = vpack.c.b16 %v1260, %v1252
    %v1501 = vpack.c.b16 %v1261, %v1253
    %v1502 = vpack.c.b16 %v1262, %v1254
    %v1503 = vpack.c.b16 %v1263, %v1255
    %v1504 = vpack.c.b16 %v1264, %v1256
    %v1505 = vpack.c.b16 %v1273, %v1265
    %v1506 = vpack.c.b16 %v1274, %v1266
    %v1507 = vpack.c.b16 %v1275, %v1267
    %v1508 = vpack.c.b16 %v1276, %v1268
    %v1509 = vpack.c.b16 %v1277, %v1269
    %v1510 = vpack.c.b16 %v1278, %v1270
    %v1511 = vpack.c.b16 %v1279, %v1271
    %v1512 = vpack.c.b16 %v1280, %v1272
    %v1513 = vpack.c.b16 %v1289, %v1281
    %v1514 = vpack.c.b16 %v1290, %v1282
    %v1515 = vpack.c.b16 %v1291, %v1283
    %v1516 = vpack.c.b16 %v1292, %v1284
    %v1517 = vpack.c.b16 %v1293, %v1285
    %v1518 = vpack.c.b16 %v1294, %v1286
    %v1519 = vpack.c.b16 %v1295, %v1287
    %v1520 = vpack.c.b16 %v1296, %v1288
    %v1521 = vpack.c.b16 %v1305, %v1297
    %v1522 = vpack.c.b16 %v1306, %v1298
    %v1523 = vpack.c.b16 %v1307, %v1299
    %v1524 = vpack.c.b16 %v1308, %v1300
    %v1525 = vpack.c.b16 %v1309, %v1301
    %v1526 = vpack.c.b16 %v1310, %v1302
    %v1527 = vpack.c.b16 %v1311, %v1303
    %v1528 = vpack.c.b16 %v1312, %v1304
    %v1529 = vpack.c.b16 %v1321, %v1313
    %v1530 = vpack.c.b16 %v1322, %v1314
    %v1531 = vpack.c.b16 %v1323, %v1315
    %v1532 = vpack.c.b16 %v1324, %v1316
    %v1533 = vpack.c.b16 %v1325, %v1317
    %v1534 = vpack.c.b16 %v1326, %v1318
    %v1535 = vpack.c.b16 %v1327, %v1319
    %v1536 = vpack.c.b16 %v1328, %v1320
    %v1537 = vpack.c.b16 %v1337, %v1329
    %v1538 = vpack.c.b16 %v1338, %v1330
    %v1539 = vpack.c.b16 %v1339, %v1331
    %v1540 = vpack.c.b16 %v1340, %v1332
    %v1541 = vpack.c.b16 %v1341, %v1333
    %v1542 = vpack.c.b16 %v1342, %v1334
    %v1543 = vpack.c.b16 %v1343, %v1335
    %v1544 = vpack.c.b16 %v1344, %v1336
    %v1545 = vpack.c.b16 %v1353, %v1345
    %v1546 = vpack.c.b16 %v1354, %v1346
    %v1547 = vpack.c.b16 %v1355, %v1347
    %v1548 = vpack.c.b16 %v1356, %v1348
    %v1549 = vpack.c.b16 %v1357, %v1349
    %v1550 = vpack.c.b16 %v1358, %v1350
    %v1551 = vpack.c.b16 %v1359, %v1351
    %v1552 = vpack.c.b16 %v1360, %v1352
    %v1553 = vpack.c.b16 %v1369, %v1361
    %v1554 = vpack.c.b16 %v1370, %v1362
    %v1555 = vpack.c.b16 %v1371, %v1363
    %v1556 = vpack.c.b16 %v1372, %v1364
    %v1557 = vpack.c.b16 %v1373, %v1365
    %v1558 = vpack.c.b16 %v1374, %v1366
    %v1559 = vpack.c.b16 %v1375, %v1367
    %v1560 = vpack.c.b16 %v1376, %v1368
    %v1561 = vpack.c.b16 %v1385, %v1377
    %v1562 = vpack.c.b16 %v1386, %v1378
    %v1563 = vpack.c.b16 %v1387, %v1379
    %v1564 = vpack.c.b16 %v1388, %v1380
    %v1565 = vpack.c.b16 %v1389, %v1381
    %v1566 = vpack.c.b16 %v1390, %v1382
    %v1567 = vpack.c.b16 %v1391, %v1383
    %v1568 = vpack.c.b16 %v1392, %v1384
    %v1569 = vpack.c.b16 %v1401, %v1393
    %v1570 = vpack.c.b16 %v1402, %v1394
    %v1571 = vpack.c.b16 %v1403, %v1395
    %v1572 = vpack.c.b16 %v1404, %v1396
    %v1573 = vpack.c.b16 %v1405, %v1397
    %v1574 = vpack.c.b16 %v1406, %v1398
    %v1575 = vpack.c.b16 %v1407, %v1399
    %v1576 = vpack.c.b16 %v1408, %v1400
    %v1577 = vpack.c.b16 %v1417, %v1409
    %v1578 = vpack.c.b16 %v1418, %v1410
    %v1579 = vpack.c.b16 %v1419, %v1411
    %v1580 = vpack.c.b16 %v1420, %v1412
    %v1581 = vpack.c.b16 %v1421, %v1413
    %v1582 = vpack.c.b16 %v1422, %v1414
    %v1583 = vpack.c.b16 %v1423, %v1415
    %v1584 = vpack.c.b16 %v1424, %v1416
    %v1585 = vpack.c.b16 %v1433, %v1425
    %v1586 = vpack.c.b16 %v1434, %v1426
    %v1587 = vpack.c.b16 %v1435, %v1427
    %v1588 = vpack.c.b16 %v1436, %v1428
    %v1589 = vpack.c.b16 %v1437, %v1429
    %v1590 = vpack.c.b16 %v1438, %v1430
    %v1591 = vpack.c.b16 %v1439, %v1431
    %v1592 = vpack.c.b16 %v1440, %v1432
    %v1593 = vpack.c.b16 %v1449, %v1441
    %v1594 = vpack.c.b16 %v1450, %v1442
    %v1595 = vpack.c.b16 %v1451, %v1443
    %v1596 = vpack.c.b16 %v1452, %v1444
    %v1597 = vpack.c.b16 %v1453, %v1445
    %v1598 = vpack.c.b16 %v1454, %v1446
    %v1599 = vpack.c.b16 %v1455, %v1447
    %v1600 = vpack.c.b16 %v1456, %v1448
    %v1601 = vpack.c.b16 %v1465, %v1457
    %v1602 = vpack.c.b16 %v1466, %v1458
    %v1603 = vpack.c.b16 %v1467, %v1459
    %v1604 = vpack.c.b16 %v1468, %v1460
    %v1605 = vpack.c.b16 %v1469, %v1461
    %v1606 = vpack.c.b16 %v1470, %v1462
    %v1607 = vpack.c.b16 %v1471, %v1463
    %v1608 = vpack.c.b16 %v1472, %v1464
    %v1609 = vpack.c.b16 %v1481, %v1473
    %v1610 = vpack.c.b16 %v1482, %v1474
    %v1611 = vpack.c.b16 %v1483, %v1475
    %v1612 = vpack.c.b16 %v1484, %v1476
    %v1613 = vpack.c.b16 %v1485, %v1477
    %v1614 = vpack.c.b16 %v1486, %v1478
    %v1615 = vpack.c.b16 %v1487, %v1479
    %v1616 = vpack.c.b16 %v1488, %v1480
    %v1746 = vlaneseq
    %v1747 = vshrl.u32 %v1746, 7
    %v1748 = vsub.s32 0, %v1747
    %v1749 = vrot.slane %v1104, %v1748
    %v1750 = vlaneseq
    %v1751 = vshrl.u32 %v1750, 7
    %v1752 = vsub.s32 1, %v1751
    %v1753 = vrot.slane %v1104, %v1752
    %v1754 = vlaneseq
    %v1755 = vshrl.u32 %v1754, 7
    %v1756 = vsub.s32 2, %v1755
    %v1757 = vrot.slane %v1104, %v1756
    %v1758 = vlaneseq
    %v1759 = vshrl.u32 %v1758, 7
    %v1760 = vsub.s32 3, %v1759
    %v1761 = vrot.slane %v1104, %v1760
    %v1762 = vlaneseq
    %v1763 = vshrl.u32 %v1762, 7
    %v1764 = vsub.s32 4, %v1763
    %v1765 = vrot.slane %v1104, %v1764
    %v1766 = vlaneseq
    %v1767 = vshrl.u32 %v1766, 7
    %v1768 = vsub.s32 5, %v1767
    %v1769 = vrot.slane %v1104, %v1768
    %v1770 = vlaneseq
    %v1771 = vshrl.u32 %v1770, 7
    %v1772 = vsub.s32 6, %v1771
    %v1773 = vrot.slane %v1104, %v1772
    %v1774 = vlaneseq
    %v1775 = vshrl.u32 %v1774, 7
    %v1776 = vsub.s32 7, %v1775
    %v1777 = vrot.slane %v1104, %v1776
    %1786 = vmatprep.subr.bf16.mxu0 %v1490
    %1787 = vmatpush1.bf16.msra.mxu0 %v1489
    %1788 = vmatprep.subr.bf16.mxu0 %v1498
    %1789 = vmatpush1.bf16.msra.mxu0 %v1497
    %1790 = vmatprep.subr.bf16.mxu0 %v1506
    %1791 = vmatpush1.bf16.msra.mxu0 %v1505
    %1792 = vmatprep.subr.bf16.mxu0 %v1514
    %1793 = vmatpush1.bf16.msra.mxu0 %v1513
    %1794 = vmatprep.subr.bf16.mxu0 %v1522
    %1795 = vmatpush1.bf16.msra.mxu0 %v1521
    %1796 = vmatprep.subr.bf16.mxu0 %v1530
    %1797 = vmatpush1.bf16.msra.mxu0 %v1529
    %1798 = vmatprep.subr.bf16.mxu0 %v1538
    %1799 = vmatpush1.bf16.msra.mxu0 %v1537
    %1800 = vmatprep.subr.bf16.mxu0 %v1546
    %1801 = vmatpush1.bf16.msra.mxu0 %v1545
    %1802 = vmatprep.subr.bf16.mxu0 %v1554
    %1803 = vmatpush1.bf16.msra.mxu0 %v1553
    %1804 = vmatprep.subr.bf16.mxu0 %v1562
    %1805 = vmatpush1.bf16.msra.mxu0 %v1561
    %1806 = vmatprep.subr.bf16.mxu0 %v1570
    %1807 = vmatpush1.bf16.msra.mxu0 %v1569
    %1808 = vmatprep.subr.bf16.mxu0 %v1578
    %1809 = vmatpush1.bf16.msra.mxu0 %v1577
    %1810 = vmatprep.subr.bf16.mxu0 %v1586
    %1811 = vmatpush1.bf16.msra.mxu0 %v1585
    %1812 = vmatprep.subr.bf16.mxu0 %v1594
    %1813 = vmatpush1.bf16.msra.mxu0 %v1593
    %1814 = vmatprep.subr.bf16.mxu0 %v1602
    %1815 = vmatpush1.bf16.msra.mxu0 %v1601
    %1816 = vmatprep.subr.bf16.mxu0 %v1610
    %1817 = vmatpush1.bf16.msra.mxu0 %v1609
    %1818 = vmatprep.mubr.bf16.mxu0 %v975
    %1819 = vmatmul.mubr.bf16.gmra.mrb[0].mxu0 %v974
    %v1820 = vpop.f32.mrb[0].mxu0
    %v1821 = vadd.f32 %v1749, %v1820
    %v1822 = vpop.f32.mrb[0].mxu0
    %v1823 = vadd.f32 %v1753, %v1822
    %v1824 = vpop.f32.mrb[0].mxu0
    %v1825 = vpop.f32.mrb[0].mxu0
    %1826 = vdwg.mxu0
    %1827 = vmatprep.subr.bf16.mxu0 %v1492
    %1828 = vmatpush1.bf16.msra.mxu0 %v1491
    %1829 = vmatprep.subr.bf16.mxu0 %v1500
    %1830 = vmatpush1.bf16.msra.mxu0 %v1499
    %1831 = vmatprep.subr.bf16.mxu0 %v1508
    %1832 = vmatpush1.bf16.msra.mxu0 %v1507
    %1833 = vmatprep.subr.bf16.mxu0 %v1516
    %1834 = vmatpush1.bf16.msra.mxu0 %v1515
    %1835 = vmatprep.subr.bf16.mxu0 %v1524
    %1836 = vmatpush1.bf16.msra.mxu0 %v1523
    %1837 = vmatprep.subr.bf16.mxu0 %v1532
    %1838 = vmatpush1.bf16.msra.mxu0 %v1531
    %1839 = vmatprep.subr.bf16.mxu0 %v1540
    %1840 = vmatpush1.bf16.msra.mxu0 %v1539
    %1841 = vmatprep.subr.bf16.mxu0 %v1548
    %1842 = vmatpush1.bf16.msra.mxu0 %v1547
    %1843 = vmatprep.subr.bf16.mxu0 %v1556
    %1844 = vmatpush1.bf16.msra.mxu0 %v1555
    %1845 = vmatprep.subr.bf16.mxu0 %v1564
    %1846 = vmatpush1.bf16.msra.mxu0 %v1563
    %1847 = vmatprep.subr.bf16.mxu0 %v1572
    %1848 = vmatpush1.bf16.msra.mxu0 %v1571
    %1849 = vmatprep.subr.bf16.mxu0 %v1580
    %1850 = vmatpush1.bf16.msra.mxu0 %v1579
    %1851 = vmatprep.subr.bf16.mxu0 %v1588
    %1852 = vmatpush1.bf16.msra.mxu0 %v1587
    %1853 = vmatprep.subr.bf16.mxu0 %v1596
    %1854 = vmatpush1.bf16.msra.mxu0 %v1595
    %1855 = vmatprep.subr.bf16.mxu0 %v1604
    %1856 = vmatpush1.bf16.msra.mxu0 %v1603
    %1857 = vmatprep.subr.bf16.mxu0 %v1612
    %1858 = vmatpush1.bf16.msra.mxu0 %v1611
    %1859 = vmatprep.mubr.bf16.mxu0 %v975
    %1860 = vmatmul.mubr.bf16.gmra.mrb[0].mxu0 %v974
    %v1861 = vpop.f32.mrb[0].mxu0
    %v1862 = vadd.f32 %v1757, %v1861
    %v1863 = vpop.f32.mrb[0].mxu0
    %v1864 = vadd.f32 %v1761, %v1863
    %v1865 = vpop.f32.mrb[0].mxu0
    %v1866 = vpop.f32.mrb[0].mxu0
    %1867 = vdwg.mxu0
    %1868 = vmatprep.subr.bf16.mxu0 %v1494
    %1869 = vmatpush1.bf16.msra.mxu0 %v1493
    %1870 = vmatprep.subr.bf16.mxu0 %v1502
    %1871 = vmatpush1.bf16.msra.mxu0 %v1501
    %1872 = vmatprep.subr.bf16.mxu0 %v1510
    %1873 = vmatpush1.bf16.msra.mxu0 %v1509
    %1874 = vmatprep.subr.bf16.mxu0 %v1518
    %1875 = vmatpush1.bf16.msra.mxu0 %v1517
    %1876 = vmatprep.subr.bf16.mxu0 %v1526
    %1877 = vmatpush1.bf16.msra.mxu0 %v1525
    %1878 = vmatprep.subr.bf16.mxu0 %v1534
    %1879 = vmatpush1.bf16.msra.mxu0 %v1533
    %1880 = vmatprep.subr.bf16.mxu0 %v1542
    %1881 = vmatpush1.bf16.msra.mxu0 %v1541
    %1882 = vmatprep.subr.bf16.mxu0 %v1550
    %1883 = vmatpush1.bf16.msra.mxu0 %v1549
    %1884 = vmatprep.subr.bf16.mxu0 %v1558
    %1885 = vmatpush1.bf16.msra.mxu0 %v1557
    %1886 = vmatprep.subr.bf16.mxu0 %v1566
    %1887 = vmatpush1.bf16.msra.mxu0 %v1565
    %1888 = vmatprep.subr.bf16.mxu0 %v1574
    %1889 = vmatpush1.bf16.msra.mxu0 %v1573
    %1890 = vmatprep.subr.bf16.mxu0 %v1582
    %1891 = vmatpush1.bf16.msra.mxu0 %v1581
    %1892 = vmatprep.subr.bf16.mxu0 %v1590
    %1893 = vmatpush1.bf16.msra.mxu0 %v1589
    %1894 = vmatprep.subr.bf16.mxu0 %v1598
    %1895 = vmatpush1.bf16.msra.mxu0 %v1597
    %1896 = vmatprep.subr.bf16.mxu0 %v1606
    %1897 = vmatpush1.bf16.msra.mxu0 %v1605
    %1898 = vmatprep.subr.bf16.mxu0 %v1614
    %1899 = vmatpush1.bf16.msra.mxu0 %v1613
    %1900 = vmatprep.mubr.bf16.mxu0 %v975
    %1901 = vmatmul.mubr.bf16.gmra.mrb[0].mxu0 %v974
    %v1902 = vpop.f32.mrb[0].mxu0
    %v1903 = vadd.f32 %v1765, %v1902
    %v1904 = vpop.f32.mrb[0].mxu0
    %v1905 = vadd.f32 %v1769, %v1904
    %v1906 = vpop.f32.mrb[0].mxu0
    %v1907 = vpop.f32.mrb[0].mxu0
    %1908 = vdwg.mxu0
    %1909 = vmatprep.subr.bf16.mxu0 %v1496
    %1910 = vmatpush1.bf16.msra.mxu0 %v1495
    %1911 = vmatprep.subr.bf16.mxu0 %v1504
    %1912 = vmatpush1.bf16.msra.mxu0 %v1503
    %1913 = vmatprep.subr.bf16.mxu0 %v1512
    %1914 = vmatpush1.bf16.msra.mxu0 %v1511
    %1915 = vmatprep.subr.bf16.mxu0 %v1520
    %1916 = vmatpush1.bf16.msra.mxu0 %v1519
    %1917 = vmatprep.subr.bf16.mxu0 %v1528
    %1918 = vmatpush1.bf16.msra.mxu0 %v1527
    %1919 = vmatprep.subr.bf16.mxu0 %v1536
    %1920 = vmatpush1.bf16.msra.mxu0 %v1535
    %1921 = vmatprep.subr.bf16.mxu0 %v1544
    %1922 = vmatpush1.bf16.msra.mxu0 %v1543
    %1923 = vmatprep.subr.bf16.mxu0 %v1552
    %1924 = vmatpush1.bf16.msra.mxu0 %v1551
    %1925 = vmatprep.subr.bf16.mxu0 %v1560
    %1926 = vmatpush1.bf16.msra.mxu0 %v1559
    %1927 = vmatprep.subr.bf16.mxu0 %v1568
    %1928 = vmatpush1.bf16.msra.mxu0 %v1567
    %1929 = vmatprep.subr.bf16.mxu0 %v1576
    %1930 = vmatpush1.bf16.msra.mxu0 %v1575
    %1931 = vmatprep.subr.bf16.mxu0 %v1584
    %1932 = vmatpush1.bf16.msra.mxu0 %v1583
    %1933 = vmatprep.subr.bf16.mxu0 %v1592
    %1934 = vmatpush1.bf16.msra.mxu0 %v1591
    %1935 = vmatprep.subr.bf16.mxu0 %v1600
    %1936 = vmatpush1.bf16.msra.mxu0 %v1599
    %1937 = vmatprep.subr.bf16.mxu0 %v1608
    %1938 = vmatpush1.bf16.msra.mxu0 %v1607
    %1939 = vmatprep.subr.bf16.mxu0 %v1616
    %1940 = vmatpush1.bf16.msra.mxu0 %v1615
    %1941 = vmatprep.mubr.bf16.mxu0 %v975
    %1942 = vmatmul.mubr.bf16.gmra.mrb[0].mxu0 %v974
    %v1943 = vpop.f32.mrb[0].mxu0
    %v1944 = vadd.f32 %v1773, %v1943
    %v1945 = vpop.f32.mrb[0].mxu0
    %v1946 = vadd.f32 %v1777, %v1945
    %v1947 = vpop.f32.mrb[0].mxu0
    %v1948 = vpop.f32.mrb[0].mxu0
    %1949 = vdwg.mxu0
    %v1958 = vcombine.low %v1821, %v1823
    %v1959 = vcombine.low %v1862, %v1864
    %v1960 = vcombine.low %v1903, %v1905
    %v1961 = vcombine.low %v1944, %v1946
    %v1963 = vunpack.c.l.s4 1966171168
    %v1964 = vunpack.c.0.s8 %v1963
    %v1965 = vlaneseq
    %v1966 = vshrl.u32 %v1965, 7
    %v1967 = vsub.s32 %v1964, %v1966
    %v1968 = vrot.slane %v1958, %v1967
    %v1970 = vunpack.c.l.s4 1966171168
    %v1971 = vunpack.c.0.s8 %v1970
    %v1972 = vlaneseq
    %v1973 = vshrl.u32 %v1972, 7
    %v1974 = vsub.s32 %v1971, %v1973
    %v1975 = vrot.slane %v1959, %v1974
    %v1977 = vunpack.c.l.s4 1966171168
    %v1978 = vunpack.c.0.s8 %v1977
    %v1979 = vlaneseq
    %v1980 = vshrl.u32 %v1979, 7
    %v1981 = vsub.s32 %v1978, %v1980
    %v1982 = vrot.slane %v1960, %v1981
    %v1984 = vunpack.c.l.s4 1966171168
    %v1985 = vunpack.c.0.s8 %v1984
    %v1986 = vlaneseq
    %v1987 = vshrl.u32 %v1986, 7
    %v1988 = vsub.s32 %v1985, %v1987
    %v1989 = vrot.slane %v1961, %v1988
    %v1990 = vcombine.low %v1968, %v1975
    %v1991 = vcombine.low %v1982, %v1989
    %v1993 = vunpack.c.l.s4 1966171168
    %v1994 = vunpack.c.0.s8 %v1993
    %v1995 = vlaneseq
    %v1996 = vshrl.u32 %v1995, 7
    %v1997 = vsub.s32 %v1994, %v1996
    %v1998 = vrot.slane %v1990, %v1997
    %v2000 = vunpack.c.l.s4 1966171168
    %v2001 = vunpack.c.0.s8 %v2000
    %v2002 = vlaneseq
    %v2003 = vshrl.u32 %v2002, 7
    %v2004 = vsub.s32 %v2001, %v2003
    %v2005 = vrot.slane %v1991, %v2004
    %v2006 = vcombine.low %v1998, %v2005
    %v2008 = vlaneseq
    %vm2009 = vcmp.ge.s32.totalorder %v2008, 0
    %vm2010 = vcmp.lt.s32.totalorder %v2008, 960
    %vm2011 = vmand %vm2009, %vm2010
    %2012 = vst.msk [vmem:[#allocation2] sm:$0xff] %vm2011, %v2006
    // Predicated region
    $region22: #{se_bottleneck.1} parent=1 // pred_check
      _
    $region23: #{se_bottleneck.1} parent=1 // pred_check_branch
      %2014 = sbr.rel (0) target = $region25
    $region24: #{se_bottleneck.1} parent=1 // pred_region
      %s2016 = ssub.s32 128, 128
      %2017 = vsyncadd [#allocation3], %s2016
      %s2019 = sshll.u32 [#allocation2], 4
      %s2020 = int_to_ptr.vmem [resolvable:$true] %s2019
      %2022 = dma.vmem_to_hbm [thread:$0]  %s2020, 128, %s5, [#allocation3]
    $region25: #{se_bottleneck.1} parent=1 // pred_fallthru
      _
    // Predicated region
    $region26: #{se_bottleneck.1} parent=1 // pred_check
      _
    $region27: #{se_bottleneck.1} parent=1 // pred_check_branch
      %2024 = sbr.rel (0) target = $region29
    $region28: #{se_bottleneck.1} parent=1 // pred_region
      %2025 = dma.done [#allocation3], 128
    $region29: #{se_bottleneck.1} parent=1 // pred_fallthru
      _
    %2026 = vsyncpa [#allocation3], 1

</llo_original>
